<compile_context>
chip_gen: v7x
topology: tpu7x:2x2x1
jax: 0.10.0
libtpu: 0.0.40
codegen_flags: <defaults>
</compile_context>

<pallas_src>
import functools

import jax
import jax.numpy as jnp
from jax import lax
from jax.experimental import pallas as pl
from jax.experimental.pallas import tpu as pltpu

INPUT_SIZE = 2
HIDDEN = 256
OUT_DIM = 1
OUT_LANES = 128       # lane-dense kernel output width
SUBLANE = 8           # f32 sublane packing
MAX_T_CHUNK = 16      # max LSTM steps per grid block (fully unrolled inside)


def _gate_act_dtype():
    """bf16 gate activations on chips with bf16 VPU/EUP (v6e/v7x); f32 otherwise."""
    try:
        kind = jax.devices()[0].device_kind.lower()
    except Exception:  # pragma: no cover
        return jnp.float32
    if "v6" in kind or "v7" in kind:
        return jnp.bfloat16
    return jnp.float32


def _largest_divisor_leq(n, cap):
    for d in range(min(n, cap), 0, -1):
        if n % d == 0:
            return d
    return 1


def _reorder_gate_cols(w, axis):
    """PyTorch gate order [i|f|g|o] -> [i|f|o|g] (sigmoid gates contiguous, tanh last)."""
    i, f, g, o = jnp.split(w, 4, axis=axis)
    return jnp.concatenate([i, f, o, g], axis=axis)


def lstm_fc_kernel(xp_ref, whh_ref, wfc_ref, bfc_ref, out_ref, h_ref, c_ref,
                   *, steps_per_block, act_dtype):
    """One grid step = `steps_per_block` LSTM steps over a streamed xp chunk.

    xp_ref  : (TC*Bp, 4H) f32   precomputed input projection + bias, gate order [i|f|o|g]
    whh_ref : (H, 4H)     bf16  hidden->gates weights, gate order [i|f|o|g]
    wfc_ref : (1, H)      f32   fc weight as a row
    bfc_ref : (1, 1)      f32   fc bias
    out_ref : (Bp, 128)   f32   lane-dense output slab; column 0 holds the result
    h_ref   : (Bp, H)     bf16  persistent hidden state (scratch)
    c_ref   : (Bp, H)     f32   persistent cell state (scratch)
    """
    t_blk = pl.program_id(0)
    Bp, H = c_ref.shape

    @pl.when(t_blk == 0)
    def _init():
        h_ref[...] = jnp.zeros_like(h_ref)
        c_ref[...] = jnp.zeros_like(c_ref)

    # Load W_hh once per grid block; the unrolled step loop reuses these vregs so the
    # MXU weight push can stay resident across steps (see TODO(synk) in header).
    whh = whh_ref[...]                                   # (H, 4H) bf16

    def step(s, carry):
        h, c = carry                                     # h: bf16, c: f32
        row = pl.multiple_of(s * Bp, SUBLANE)
        gates = xp_ref[pl.ds(row, Bp), :] + jnp.dot(
            h, whh, preferred_element_type=jnp.float32)  # (Bp, 4H) f32
        g_act = gates.astype(act_dtype)
        sig = jax.nn.sigmoid(g_act[:, : 3 * H])          # [i | f | o]
        g_in = jnp.tanh(g_act[:, 3 * H:])                # g
        i_g = sig[:, 0 * H:1 * H]
        f_g = sig[:, 1 * H:2 * H]
        o_g = sig[:, 2 * H:3 * H]
        c_new = f_g * c + i_g * g_in                     # promotes to f32
        tanh_c = jnp.tanh(c_new.astype(act_dtype))
        h_new = (o_g * tanh_c).astype(jnp.bfloat16)
        return h_new, c_new

    h_last, c_last = lax.fori_loop(
        0, steps_per_block, step, (h_ref[...], c_ref[...]), unroll=True)
    h_ref[...] = h_last
    c_ref[...] = c_last

    @pl.when(t_blk == pl.num_programs(0) - 1)
    def _finalize():
        # Dropout is identity in eval/inference mode.
        # FC(256->1) as VPU multiply + cross-lane reduction; then ReLU.
        y = jnp.sum(h_last.astype(jnp.float32) * wfc_ref[...], axis=-1,
                    keepdims=True) + bfc_ref[...]        # (Bp, 1)
        out_ref[...] = jnp.maximum(jnp.broadcast_to(y, out_ref.shape), 0.0)


def model_forward(x_btI, params):
    """x_btI: (B, T, I) batch-first, like PyTorch. Returns (B, 1)."""
    w_ih, w_hh, b_ih, b_hh, w_fc, b_fc = params
    B, T, I = x_btI.shape
    H = w_hh.shape[1]
    G4 = 4 * H

    # Pad batch to a sublane multiple so every (Bp, 4H) vreg row group is fully packed.
    Bp = max(SUBLANE, ((B + SUBLANE - 1) // SUBLANE) * SUBLANE)
    TC = _largest_divisor_leq(T, MAX_T_CHUNK)
    n_blocks = T // TC

    # --- parameter packing (gate column order [i|f|o|g]) ---
    wih_t = _reorder_gate_cols(jnp.transpose(w_ih).astype(jnp.float32), axis=1)   # (I, 4H)
    whh_t = _reorder_gate_cols(jnp.transpose(w_hh), axis=1).astype(jnp.bfloat16)  # (H, 4H)
    b_all = _reorder_gate_cols(
        (b_ih + b_hh).reshape(1, G4).astype(jnp.float32), axis=1)                 # (1, 4H)
    wfc_row = w_fc.reshape(1, H).astype(jnp.float32)                              # (1, H)
    bfc = b_fc.reshape(1, 1).astype(jnp.float32)                                  # (1, 1)

    # --- input projection in XLA (K=2, fully parallel, off the serial path) ---
    xp = jnp.einsum("bti,ih->bth", x_btI.astype(jnp.float32), wih_t) + b_all      # (B, T, 4H)
    xp = jnp.pad(xp, ((0, Bp - B), (0, 0), (0, 0)))                               # (Bp, T, 4H)
    xp_2d = jnp.transpose(xp, (1, 0, 2)).reshape(T * Bp, G4)                      # (T*Bp, 4H)

    kernel = functools.partial(
        lstm_fc_kernel, steps_per_block=TC, act_dtype=_gate_act_dtype())

    out = pl.pallas_call(
        kernel,
        out_shape=jax.ShapeDtypeStruct((Bp, OUT_LANES), jnp.float32),
        grid_spec=pltpu.PrefetchScalarGridSpec(
            num_scalar_prefetch=0,
            grid=(n_blocks,),
            in_specs=[
                pl.BlockSpec((TC * Bp, G4), lambda t: (t, 0)),   # xp chunk (streamed)
                pl.BlockSpec((H, G4), lambda t: (0, 0)),         # W_hh (resident)
                pl.BlockSpec((1, H), lambda t: (0, 0)),          # fc weight
                pl.BlockSpec((1, 1), lambda t: (0, 0)),          # fc bias
            ],
            out_specs=pl.BlockSpec((Bp, OUT_LANES), lambda t: (0, 0)),
            scratch_shapes=[
                pltpu.VMEM((Bp, H), jnp.bfloat16),               # h (persists across blocks)
                pltpu.VMEM((Bp, H), jnp.float32),                # c (persists across blocks)
            ],
        ),
        compiler_params=pltpu.CompilerParams(
            dimension_semantics=("arbitrary",),
        ),
    )(xp_2d, whh_t, wfc_row, bfc)

    return out[:B, :OUT_DIM]


def reference_forward(x, params):
    """Pure-JAX f32 reference matching the PyTorch module (eval mode)."""
    w_ih, w_hh, b_ih, b_hh, w_fc, b_fc = params
    B, T, I = x.shape
    H = w_hh.shape[1]
    h = jnp.zeros((B, H), jnp.float32)
    c = jnp.zeros((B, H), jnp.float32)
    x = x.astype(jnp.float32)
    for t in range(T):
        gates = x[:, t, :] @ w_ih.T + b_ih + h @ w_hh.T + b_hh
        i_g = jax.nn.sigmoid(gates[:, 0 * H:1 * H])
        f_g = jax.nn.sigmoid(gates[:, 1 * H:2 * H])
        g_g = jnp.tanh(gates[:, 2 * H:3 * H])
        o_g = jax.nn.sigmoid(gates[:, 3 * H:4 * H])
        c = f_g * c + i_g * g_g
        h = o_g * jnp.tanh(c)
    y = h @ w_fc.T + b_fc
    return jnp.maximum(y, 0.0)


def init_params(key, input_size=INPUT_SIZE, hidden=HIDDEN, out_dim=OUT_DIM):
    """Deterministic PyTorch-style uniform(-1/sqrt(H), 1/sqrt(H)) init."""
    k1, k2, k3, k4, k5, k6 = jax.random.split(key, 6)
    s = 1.0 / jnp.sqrt(jnp.float32(hidden))
    w_ih = jax.random.uniform(k1, (4 * hidden, input_size), jnp.float32, -s, s)
    w_hh = jax.random.uniform(k2, (4 * hidden, hidden), jnp.float32, -s, s)
    b_ih = jax.random.uniform(k3, (4 * hidden,), jnp.float32, -s, s)
    b_hh = jax.random.uniform(k4, (4 * hidden,), jnp.float32, -s, s)
    w_fc = jax.random.uniform(k5, (out_dim, hidden), jnp.float32, -s, s)
    b_fc = jax.random.uniform(k6, (out_dim,), jnp.float32, -s, s)
    return (w_ih, w_hh, b_ih, b_hh, w_fc, b_fc)


if __name__ == "__main__":
    key = jax.random.PRNGKey(0)
    kx, kp = jax.random.split(key)

    B, T, I = 2, 8, INPUT_SIZE
    x = jax.random.normal(kx, (B, T, I), jnp.float32)
    params = init_params(kp)

    out = jax.jit(model_forward)(x, params)
    jax.block_until_ready(out)

    ref = reference_forward(x, params)
    assert out.shape == (B, OUT_DIM), out.shape
    assert bool(jnp.all(jnp.isfinite(out)))
    assert bool(jnp.allclose(out, ref, atol=5e-2, rtol=5e-2)), (out, ref)
    print("KERNEL_OK")
</pallas_src>

<mosaic_0001>
module attributes {stable_mosaic.version = 11 : i64} {
  func.func @lstm_fc_kernel(%arg0: i32, %arg1: memref<64x1024xf32, #tpu.memory_space<vmem>>, %arg2: memref<256x1024xbf16, #tpu.memory_space<vmem>>, %arg3: memref<1x256xf32, #tpu.memory_space<vmem>>, %arg4: memref<1x1xf32, #tpu.memory_space<vmem>>, %arg5: memref<8x128xf32, #tpu.memory_space<vmem>>, %arg6: memref<8x256xbf16, #tpu.memory_space<vmem>>, %arg7: memref<8x256xf32, #tpu.memory_space<vmem>>) attributes {dimension_semantics = [#tpu.dimension_semantics<arbitrary>], iteration_bounds = array<i64: 1>, scalar_prefetch = 0 : i64, scratch_operands = 2 : i64, tpu.core_type = #tpu.core_type<tc>, window_params = [{transform_indices = @transform_0, window_bounds = array<i64: 64, 1024>}, {pipeline_mode = #tpu.pipeline_mode<synchronous>, transform_indices = @transform_1, window_bounds = array<i64: 256, 1024>}, {pipeline_mode = #tpu.pipeline_mode<synchronous>, transform_indices = @transform_2, window_bounds = array<i64: 1, 256>}, {pipeline_mode = #tpu.pipeline_mode<synchronous>, transform_indices = @transform_3, window_bounds = array<i64: 1, 1>}, {pipeline_mode = #tpu.pipeline_mode<synchronous>, transform_indices = @transform_4, window_bounds = array<i64: 8, 128>}]} {
    %c0_i32 = arith.constant 0 : i32
    %0 = arith.cmpi eq, %arg0, %c0_i32 : i32
    %1 = arith.extui %0 : i1 to i32
    %c0_i32_0 = arith.constant 0 : i32
    %2 = arith.cmpi ne, %1, %c0_i32_0 : i32
    scf.if %2 {
      %cst_44 = arith.constant 0.000000e+00 : bf16
      %195 = vector.broadcast %cst_44 : bf16 to vector<8x256xbf16>
      %c0_45 = arith.constant 0 : index
      %c0_46 = arith.constant 0 : index
      %196 = vector.load %arg6[%c0_45, %c0_46] : memref<8x256xbf16, #tpu.memory_space<vmem>>, vector<8x256xbf16>
      tpu.vector_store %arg6[%c0_45, %c0_46], %195 {strides = array<i32>} : memref<8x256xbf16, #tpu.memory_space<vmem>>, vector<8x256xbf16>,
      %cst_47 = arith.constant 0.000000e+00 : f32
      %197 = vector.broadcast %cst_47 : f32 to vector<8x256xf32>
      %c0_48 = arith.constant 0 : index
      %c0_49 = arith.constant 0 : index
      %198 = vector.load %arg7[%c0_48, %c0_49] : memref<8x256xf32, #tpu.memory_space<vmem>>, vector<8x256xf32>
      tpu.vector_store %arg7[%c0_48, %c0_49], %197 {strides = array<i32>} : memref<8x256xf32, #tpu.memory_space<vmem>>, vector<8x256xf32>,
    } else {
    }
    %c0 = arith.constant 0 : index
    %c0_1 = arith.constant 0 : index
    %3 = vector.load %arg2[%c0, %c0_1] : memref<256x1024xbf16, #tpu.memory_space<vmem>>, vector<256x1024xbf16>
    %c0_2 = arith.constant 0 : index
    %c0_3 = arith.constant 0 : index
    %4 = vector.load %arg6[%c0_2, %c0_3] : memref<8x256xbf16, #tpu.memory_space<vmem>>, vector<8x256xbf16>
    %c0_4 = arith.constant 0 : index
    %c0_5 = arith.constant 0 : index
    %5 = vector.load %arg7[%c0_4, %c0_5] : memref<8x256xf32, #tpu.memory_space<vmem>>, vector<8x256xf32>
    %c0_i32_6 = arith.constant 0 : i32
    %c8_i32 = arith.constant 8 : i32
    %6 = arith.muli %c0_i32_6, %c8_i32 : i32
    %7 = tpu.assume_multiple %6, 8 : i32
    %8 = arith.index_cast %7 : i32 to index
    %c0_7 = arith.constant 0 : index
    %9 = vector.load %arg1[%8, %c0_7] : memref<64x1024xf32, #tpu.memory_space<vmem>>, vector<8x1024xf32>
    %cst = arith.constant dense<0.000000e+00> : vector<8x1024xf32>
    %10 = tpu.matmul %4, %3, %cst {dimension_numbers = #tpu.dot_dimension_numbers<[1], [0], [0], [1], [0, 0, 1, 1], [], []>} : vector<8x256xbf16>, vector<256x1024xbf16>, vector<8x1024xf32> -> vector<8x1024xf32>
    %11 = arith.addf %9, %10 : vector<8x1024xf32>
    %12 = vector.extract_strided_slice %11 {offsets = [0, 0], sizes = [8, 768], strides = [1, 1]} : vector<8x1024xf32> to vector<8x768xf32>
    %13 = arith.negf %12 : vector<8x768xf32>
    %14 = math.exp %13 : vector<8x768xf32>
    %cst_8 = arith.constant 1.000000e+00 : f32
    %15 = vector.broadcast %cst_8 : f32 to vector<8x768xf32>
    %16 = arith.addf %15, %14 : vector<8x768xf32>
    %17 = arith.divf %15, %16 : vector<8x768xf32>
    %18 = vector.extract_strided_slice %11 {offsets = [0, 768], sizes = [8, 256], strides = [1, 1]} : vector<8x1024xf32> to vector<8x256xf32>
    %19 = math.tanh %18 : vector<8x256xf32>
    %20 = vector.extract_strided_slice %17 {offsets = [0, 0], sizes = [8, 256], strides = [1, 1]} : vector<8x768xf32> to vector<8x256xf32>
    %21 = vector.extract_strided_slice %17 {offsets = [0, 256], sizes = [8, 256], strides = [1, 1]} : vector<8x768xf32> to vector<8x256xf32>
    %22 = vector.extract_strided_slice %17 {offsets = [0, 512], sizes = [8, 256], strides = [1, 1]} : vector<8x768xf32> to vector<8x256xf32>
    %23 = arith.mulf %21, %5 : vector<8x256xf32>
    %24 = arith.mulf %20, %19 : vector<8x256xf32>
    %25 = arith.addf %23, %24 : vector<8x256xf32>
    %26 = math.tanh %25 : vector<8x256xf32>
    %27 = arith.mulf %22, %26 : vector<8x256xf32>
    %28 = arith.truncf %27 : vector<8x256xf32> to vector<8x256xbf16>
    %c1_i32 = arith.constant 1 : i32
    %c8_i32_9 = arith.constant 8 : i32
    %29 = arith.muli %c1_i32, %c8_i32_9 : i32
    %30 = tpu.assume_multiple %29, 8 : i32
    %31 = arith.index_cast %30 : i32 to index
    %c0_10 = arith.constant 0 : index
    %32 = vector.load %arg1[%31, %c0_10] : memref<64x1024xf32, #tpu.memory_space<vmem>>, vector<8x1024xf32>
    %cst_11 = arith.constant dense<0.000000e+00> : vector<8x1024xf32>
    %33 = tpu.matmul %28, %3, %cst_11 {dimension_numbers = #tpu.dot_dimension_numbers<[1], [0], [0], [1], [0, 0, 1, 1], [], []>} : vector<8x256xbf16>, vector<256x1024xbf16>, vector<8x1024xf32> -> vector<8x1024xf32>
    %34 = arith.addf %32, %33 : vector<8x1024xf32>
    %35 = vector.extract_strided_slice %34 {offsets = [0, 0], sizes = [8, 768], strides = [1, 1]} : vector<8x1024xf32> to vector<8x768xf32>
    %36 = arith.negf %35 : vector<8x768xf32>
    %37 = math.exp %36 : vector<8x768xf32>
    %cst_12 = arith.constant 1.000000e+00 : f32
    %38 = vector.broadcast %cst_12 : f32 to vector<8x768xf32>
    %39 = arith.addf %38, %37 : vector<8x768xf32>
    %40 = arith.divf %38, %39 : vector<8x768xf32>
    %41 = vector.extract_strided_slice %34 {offsets = [0, 768], sizes = [8, 256], strides = [1, 1]} : vector<8x1024xf32> to vector<8x256xf32>
    %42 = math.tanh %41 : vector<8x256xf32>
    %43 = vector.extract_strided_slice %40 {offsets = [0, 0], sizes = [8, 256], strides = [1, 1]} : vector<8x768xf32> to vector<8x256xf32>
    %44 = vector.extract_strided_slice %40 {offsets = [0, 256], sizes = [8, 256], strides = [1, 1]} : vector<8x768xf32> to vector<8x256xf32>
    %45 = vector.extract_strided_slice %40 {offsets = [0, 512], sizes = [8, 256], strides = [1, 1]} : vector<8x768xf32> to vector<8x256xf32>
    %46 = arith.mulf %44, %25 : vector<8x256xf32>
    %47 = arith.mulf %43, %42 : vector<8x256xf32>
    %48 = arith.addf %46, %47 : vector<8x256xf32>
    %49 = math.tanh %48 : vector<8x256xf32>
    %50 = arith.mulf %45, %49 : vector<8x256xf32>
    %51 = arith.truncf %50 : vector<8x256xf32> to vector<8x256xbf16>
    %c2_i32 = arith.constant 2 : i32
    %c8_i32_13 = arith.constant 8 : i32
    %52 = arith.muli %c2_i32, %c8_i32_13 : i32
    %53 = tpu.assume_multiple %52, 8 : i32
    %54 = arith.index_cast %53 : i32 to index
    %c0_14 = arith.constant 0 : index
    %55 = vector.load %arg1[%54, %c0_14] : memref<64x1024xf32, #tpu.memory_space<vmem>>, vector<8x1024xf32>
    %cst_15 = arith.constant dense<0.000000e+00> : vector<8x1024xf32>
    %56 = tpu.matmul %51, %3, %cst_15 {dimension_numbers = #tpu.dot_dimension_numbers<[1], [0], [0], [1], [0, 0, 1, 1], [], []>} : vector<8x256xbf16>, vector<256x1024xbf16>, vector<8x1024xf32> -> vector<8x1024xf32>
    %57 = arith.addf %55, %56 : vector<8x1024xf32>
    %58 = vector.extract_strided_slice %57 {offsets = [0, 0], sizes = [8, 768], strides = [1, 1]} : vector<8x1024xf32> to vector<8x768xf32>
    %59 = arith.negf %58 : vector<8x768xf32>
    %60 = math.exp %59 : vector<8x768xf32>
    %cst_16 = arith.constant 1.000000e+00 : f32
    %61 = vector.broadcast %cst_16 : f32 to vector<8x768xf32>
    %62 = arith.addf %61, %60 : vector<8x768xf32>
    %63 = arith.divf %61, %62 : vector<8x768xf32>
    %64 = vector.extract_strided_slice %57 {offsets = [0, 768], sizes = [8, 256], strides = [1, 1]} : vector<8x1024xf32> to vector<8x256xf32>
    %65 = math.tanh %64 : vector<8x256xf32>
    %66 = vector.extract_strided_slice %63 {offsets = [0, 0], sizes = [8, 256], strides = [1, 1]} : vector<8x768xf32> to vector<8x256xf32>
    %67 = vector.extract_strided_slice %63 {offsets = [0, 256], sizes = [8, 256], strides = [1, 1]} : vector<8x768xf32> to vector<8x256xf32>
    %68 = vector.extract_strided_slice %63 {offsets = [0, 512], sizes = [8, 256], strides = [1, 1]} : vector<8x768xf32> to vector<8x256xf32>
    %69 = arith.mulf %67, %48 : vector<8x256xf32>
    %70 = arith.mulf %66, %65 : vector<8x256xf32>
    %71 = arith.addf %69, %70 : vector<8x256xf32>
    %72 = math.tanh %71 : vector<8x256xf32>
    %73 = arith.mulf %68, %72 : vector<8x256xf32>
    %74 = arith.truncf %73 : vector<8x256xf32> to vector<8x256xbf16>
    %c3_i32 = arith.constant 3 : i32
    %c8_i32_17 = arith.constant 8 : i32
    %75 = arith.muli %c3_i32, %c8_i32_17 : i32
    %76 = tpu.assume_multiple %75, 8 : i32
    %77 = arith.index_cast %76 : i32 to index
    %c0_18 = arith.constant 0 : index
    %78 = vector.load %arg1[%77, %c0_18] : memref<64x1024xf32, #tpu.memory_space<vmem>>, vector<8x1024xf32>
    %cst_19 = arith.constant dense<0.000000e+00> : vector<8x1024xf32>
    %79 = tpu.matmul %74, %3, %cst_19 {dimension_numbers = #tpu.dot_dimension_numbers<[1], [0], [0], [1], [0, 0, 1, 1], [], []>} : vector<8x256xbf16>, vector<256x1024xbf16>, vector<8x1024xf32> -> vector<8x1024xf32>
    %80 = arith.addf %78, %79 : vector<8x1024xf32>
    %81 = vector.extract_strided_slice %80 {offsets = [0, 0], sizes = [8, 768], strides = [1, 1]} : vector<8x1024xf32> to vector<8x768xf32>
    %82 = arith.negf %81 : vector<8x768xf32>
    %83 = math.exp %82 : vector<8x768xf32>
    %cst_20 = arith.constant 1.000000e+00 : f32
    %84 = vector.broadcast %cst_20 : f32 to vector<8x768xf32>
    %85 = arith.addf %84, %83 : vector<8x768xf32>
    %86 = arith.divf %84, %85 : vector<8x768xf32>
    %87 = vector.extract_strided_slice %80 {offsets = [0, 768], sizes = [8, 256], strides = [1, 1]} : vector<8x1024xf32> to vector<8x256xf32>
    %88 = math.tanh %87 : vector<8x256xf32>
    %89 = vector.extract_strided_slice %86 {offsets = [0, 0], sizes = [8, 256], strides = [1, 1]} : vector<8x768xf32> to vector<8x256xf32>
    %90 = vector.extract_strided_slice %86 {offsets = [0, 256], sizes = [8, 256], strides = [1, 1]} : vector<8x768xf32> to vector<8x256xf32>
    %91 = vector.extract_strided_slice %86 {offsets = [0, 512], sizes = [8, 256], strides = [1, 1]} : vector<8x768xf32> to vector<8x256xf32>
    %92 = arith.mulf %90, %71 : vector<8x256xf32>
    %93 = arith.mulf %89, %88 : vector<8x256xf32>
    %94 = arith.addf %92, %93 : vector<8x256xf32>
    %95 = math.tanh %94 : vector<8x256xf32>
    %96 = arith.mulf %91, %95 : vector<8x256xf32>
    %97 = arith.truncf %96 : vector<8x256xf32> to vector<8x256xbf16>
    %c4_i32 = arith.constant 4 : i32
    %c8_i32_21 = arith.constant 8 : i32
    %98 = arith.muli %c4_i32, %c8_i32_21 : i32
    %99 = tpu.assume_multiple %98, 8 : i32
    %100 = arith.index_cast %99 : i32 to index
    %c0_22 = arith.constant 0 : index
    %101 = vector.load %arg1[%100, %c0_22] : memref<64x1024xf32, #tpu.memory_space<vmem>>, vector<8x1024xf32>
    %cst_23 = arith.constant dense<0.000000e+00> : vector<8x1024xf32>
    %102 = tpu.matmul %97, %3, %cst_23 {dimension_numbers = #tpu.dot_dimension_numbers<[1], [0], [0], [1], [0, 0, 1, 1], [], []>} : vector<8x256xbf16>, vector<256x1024xbf16>, vector<8x1024xf32> -> vector<8x1024xf32>
    %103 = arith.addf %101, %102 : vector<8x1024xf32>
    %104 = vector.extract_strided_slice %103 {offsets = [0, 0], sizes = [8, 768], strides = [1, 1]} : vector<8x1024xf32> to vector<8x768xf32>
    %105 = arith.negf %104 : vector<8x768xf32>
    %106 = math.exp %105 : vector<8x768xf32>
    %cst_24 = arith.constant 1.000000e+00 : f32
    %107 = vector.broadcast %cst_24 : f32 to vector<8x768xf32>
    %108 = arith.addf %107, %106 : vector<8x768xf32>
    %109 = arith.divf %107, %108 : vector<8x768xf32>
    %110 = vector.extract_strided_slice %103 {offsets = [0, 768], sizes = [8, 256], strides = [1, 1]} : vector<8x1024xf32> to vector<8x256xf32>
    %111 = math.tanh %110 : vector<8x256xf32>
    %112 = vector.extract_strided_slice %109 {offsets = [0, 0], sizes = [8, 256], strides = [1, 1]} : vector<8x768xf32> to vector<8x256xf32>
    %113 = vector.extract_strided_slice %109 {offsets = [0, 256], sizes = [8, 256], strides = [1, 1]} : vector<8x768xf32> to vector<8x256xf32>
    %114 = vector.extract_strided_slice %109 {offsets = [0, 512], sizes = [8, 256], strides = [1, 1]} : vector<8x768xf32> to vector<8x256xf32>
    %115 = arith.mulf %113, %94 : vector<8x256xf32>
    %116 = arith.mulf %112, %111 : vector<8x256xf32>
    %117 = arith.addf %115, %116 : vector<8x256xf32>
    %118 = math.tanh %117 : vector<8x256xf32>
    %119 = arith.mulf %114, %118 : vector<8x256xf32>
    %120 = arith.truncf %119 : vector<8x256xf32> to vector<8x256xbf16>
    %c5_i32 = arith.constant 5 : i32
    %c8_i32_25 = arith.constant 8 : i32
    %121 = arith.muli %c5_i32, %c8_i32_25 : i32
    %122 = tpu.assume_multiple %121, 8 : i32
    %123 = arith.index_cast %122 : i32 to index
    %c0_26 = arith.constant 0 : index
    %124 = vector.load %arg1[%123, %c0_26] : memref<64x1024xf32, #tpu.memory_space<vmem>>, vector<8x1024xf32>
    %cst_27 = arith.constant dense<0.000000e+00> : vector<8x1024xf32>
    %125 = tpu.matmul %120, %3, %cst_27 {dimension_numbers = #tpu.dot_dimension_numbers<[1], [0], [0], [1], [0, 0, 1, 1], [], []>} : vector<8x256xbf16>, vector<256x1024xbf16>, vector<8x1024xf32> -> vector<8x1024xf32>
    %126 = arith.addf %124, %125 : vector<8x1024xf32>
    %127 = vector.extract_strided_slice %126 {offsets = [0, 0], sizes = [8, 768], strides = [1, 1]} : vector<8x1024xf32> to vector<8x768xf32>
    %128 = arith.negf %127 : vector<8x768xf32>
    %129 = math.exp %128 : vector<8x768xf32>
    %cst_28 = arith.constant 1.000000e+00 : f32
    %130 = vector.broadcast %cst_28 : f32 to vector<8x768xf32>
    %131 = arith.addf %130, %129 : vector<8x768xf32>
    %132 = arith.divf %130, %131 : vector<8x768xf32>
    %133 = vector.extract_strided_slice %126 {offsets = [0, 768], sizes = [8, 256], strides = [1, 1]} : vector<8x1024xf32> to vector<8x256xf32>
    %134 = math.tanh %133 : vector<8x256xf32>
    %135 = vector.extract_strided_slice %132 {offsets = [0, 0], sizes = [8, 256], strides = [1, 1]} : vector<8x768xf32> to vector<8x256xf32>
    %136 = vector.extract_strided_slice %132 {offsets = [0, 256], sizes = [8, 256], strides = [1, 1]} : vector<8x768xf32> to vector<8x256xf32>
    %137 = vector.extract_strided_slice %132 {offsets = [0, 512], sizes = [8, 256], strides = [1, 1]} : vector<8x768xf32> to vector<8x256xf32>
    %138 = arith.mulf %136, %117 : vector<8x256xf32>
    %139 = arith.mulf %135, %134 : vector<8x256xf32>
    %140 = arith.addf %138, %139 : vector<8x256xf32>
    %141 = math.tanh %140 : vector<8x256xf32>
    %142 = arith.mulf %137, %141 : vector<8x256xf32>
    %143 = arith.truncf %142 : vector<8x256xf32> to vector<8x256xbf16>
    %c6_i32 = arith.constant 6 : i32
    %c8_i32_29 = arith.constant 8 : i32
    %144 = arith.muli %c6_i32, %c8_i32_29 : i32
    %145 = tpu.assume_multiple %144, 8 : i32
    %146 = arith.index_cast %145 : i32 to index
    %c0_30 = arith.constant 0 : index
    %147 = vector.load %arg1[%146, %c0_30] : memref<64x1024xf32, #tpu.memory_space<vmem>>, vector<8x1024xf32>
    %cst_31 = arith.constant dense<0.000000e+00> : vector<8x1024xf32>
    %148 = tpu.matmul %143, %3, %cst_31 {dimension_numbers = #tpu.dot_dimension_numbers<[1], [0], [0], [1], [0, 0, 1, 1], [], []>} : vector<8x256xbf16>, vector<256x1024xbf16>, vector<8x1024xf32> -> vector<8x1024xf32>
    %149 = arith.addf %147, %148 : vector<8x1024xf32>
    %150 = vector.extract_strided_slice %149 {offsets = [0, 0], sizes = [8, 768], strides = [1, 1]} : vector<8x1024xf32> to vector<8x768xf32>
    %151 = arith.negf %150 : vector<8x768xf32>
    %152 = math.exp %151 : vector<8x768xf32>
    %cst_32 = arith.constant 1.000000e+00 : f32
    %153 = vector.broadcast %cst_32 : f32 to vector<8x768xf32>
    %154 = arith.addf %153, %152 : vector<8x768xf32>
    %155 = arith.divf %153, %154 : vector<8x768xf32>
    %156 = vector.extract_strided_slice %149 {offsets = [0, 768], sizes = [8, 256], strides = [1, 1]} : vector<8x1024xf32> to vector<8x256xf32>
    %157 = math.tanh %156 : vector<8x256xf32>
    %158 = vector.extract_strided_slice %155 {offsets = [0, 0], sizes = [8, 256], strides = [1, 1]} : vector<8x768xf32> to vector<8x256xf32>
    %159 = vector.extract_strided_slice %155 {offsets = [0, 256], sizes = [8, 256], strides = [1, 1]} : vector<8x768xf32> to vector<8x256xf32>
    %160 = vector.extract_strided_slice %155 {offsets = [0, 512], sizes = [8, 256], strides = [1, 1]} : vector<8x768xf32> to vector<8x256xf32>
    %161 = arith.mulf %159, %140 : vector<8x256xf32>
    %162 = arith.mulf %158, %157 : vector<8x256xf32>
    %163 = arith.addf %161, %162 : vector<8x256xf32>
    %164 = math.tanh %163 : vector<8x256xf32>
    %165 = arith.mulf %160, %164 : vector<8x256xf32>
    %166 = arith.truncf %165 : vector<8x256xf32> to vector<8x256xbf16>
    %c7_i32 = arith.constant 7 : i32
    %c8_i32_33 = arith.constant 8 : i32
    %167 = arith.muli %c7_i32, %c8_i32_33 : i32
    %168 = tpu.assume_multiple %167, 8 : i32
    %169 = arith.index_cast %168 : i32 to index
    %c0_34 = arith.constant 0 : index
    %170 = vector.load %arg1[%169, %c0_34] : memref<64x1024xf32, #tpu.memory_space<vmem>>, vector<8x1024xf32>
    %cst_35 = arith.constant dense<0.000000e+00> : vector<8x1024xf32>
    %171 = tpu.matmul %166, %3, %cst_35 {dimension_numbers = #tpu.dot_dimension_numbers<[1], [0], [0], [1], [0, 0, 1, 1], [], []>} : vector<8x256xbf16>, vector<256x1024xbf16>, vector<8x1024xf32> -> vector<8x1024xf32>
    %172 = arith.addf %170, %171 : vector<8x1024xf32>
    %173 = vector.extract_strided_slice %172 {offsets = [0, 0], sizes = [8, 768], strides = [1, 1]} : vector<8x1024xf32> to vector<8x768xf32>
    %174 = arith.negf %173 : vector<8x768xf32>
    %175 = math.exp %174 : vector<8x768xf32>
    %cst_36 = arith.constant 1.000000e+00 : f32
    %176 = vector.broadcast %cst_36 : f32 to vector<8x768xf32>
    %177 = arith.addf %176, %175 : vector<8x768xf32>
    %178 = arith.divf %176, %177 : vector<8x768xf32>
    %179 = vector.extract_strided_slice %172 {offsets = [0, 768], sizes = [8, 256], strides = [1, 1]} : vector<8x1024xf32> to vector<8x256xf32>
    %180 = math.tanh %179 : vector<8x256xf32>
    %181 = vector.extract_strided_slice %178 {offsets = [0, 0], sizes = [8, 256], strides = [1, 1]} : vector<8x768xf32> to vector<8x256xf32>
    %182 = vector.extract_strided_slice %178 {offsets = [0, 256], sizes = [8, 256], strides = [1, 1]} : vector<8x768xf32> to vector<8x256xf32>
    %183 = vector.extract_strided_slice %178 {offsets = [0, 512], sizes = [8, 256], strides = [1, 1]} : vector<8x768xf32> to vector<8x256xf32>
    %184 = arith.mulf %182, %163 : vector<8x256xf32>
    %185 = arith.mulf %181, %180 : vector<8x256xf32>
    %186 = arith.addf %184, %185 : vector<8x256xf32>
    %187 = math.tanh %186 : vector<8x256xf32>
    %188 = arith.mulf %183, %187 : vector<8x256xf32>
    %189 = arith.truncf %188 : vector<8x256xf32> to vector<8x256xbf16>
    %c8_i32_37 = arith.constant 8 : i32
    %c0_38 = arith.constant 0 : index
    %c0_39 = arith.constant 0 : index
    %190 = vector.load %arg6[%c0_38, %c0_39] : memref<8x256xbf16, #tpu.memory_space<vmem>>, vector<8x256xbf16>
    tpu.vector_store %arg6[%c0_38, %c0_39], %189 {strides = array<i32>} : memref<8x256xbf16, #tpu.memory_space<vmem>>, vector<8x256xbf16>,
    %c0_40 = arith.constant 0 : index
    %c0_41 = arith.constant 0 : index
    %191 = vector.load %arg7[%c0_40, %c0_41] : memref<8x256xf32, #tpu.memory_space<vmem>>, vector<8x256xf32>
    tpu.vector_store %arg7[%c0_40, %c0_41], %186 {strides = array<i32>} : memref<8x256xf32, #tpu.memory_space<vmem>>, vector<8x256xf32>,
    %c0_i32_42 = arith.constant 0 : i32
    %192 = arith.cmpi eq, %arg0, %c0_i32_42 : i32
    %193 = arith.extui %192 : i1 to i32
    %c0_i32_43 = arith.constant 0 : i32
    %194 = arith.cmpi ne, %193, %c0_i32_43 : i32
    scf.if %194 {
      %195 = arith.extf %189 : vector<8x256xbf16> to vector<8x256xf32>
      %c0_44 = arith.constant 0 : index
      %c0_45 = arith.constant 0 : index
      %196 = vector.load %arg3[%c0_44, %c0_45] : memref<1x256xf32, #tpu.memory_space<vmem>>, vector<1x256xf32>
      %197 = vector.broadcast %196 : vector<1x256xf32> to vector<8x256xf32>
      %198 = arith.mulf %195, %197 : vector<8x256xf32>
      %cst_46 = arith.constant dense<0.000000e+00> : vector<8xf32>
      %199 = vector.multi_reduction <add>, %198, %cst_46 [1] : vector<8x256xf32> to vector<8xf32>
      %200 = vector.shape_cast %199 : vector<8xf32> to vector<8x1xf32>
      %c0_47 = arith.constant 0 : index
      %c0_48 = arith.constant 0 : index
      %201 = vector.load %arg4[%c0_47, %c0_48] : memref<1x1xf32, #tpu.memory_space<vmem>>, vector<1x1xf32>
      %202 = vector.broadcast %201 : vector<1x1xf32> to vector<8x1xf32>
      %203 = arith.addf %200, %202 : vector<8x1xf32>
      %204 = vector.shape_cast %203 : vector<8x1xf32> to vector<8x1xf32>
      %205 = vector.broadcast %204 : vector<8x1xf32> to vector<8x128xf32>
      %cst_49 = arith.constant 0.000000e+00 : f32
      %206 = vector.broadcast %cst_49 : f32 to vector<8x128xf32>
      %207 = arith.maximumf %205, %206 : vector<8x128xf32>
      %c0_50 = arith.constant 0 : index
      %c0_51 = arith.constant 0 : index
      %208 = vector.load %arg5[%c0_50, %c0_51] : memref<8x128xf32, #tpu.memory_space<vmem>>, vector<8x128xf32>
      tpu.vector_store %arg5[%c0_50, %c0_51], %207 {strides = array<i32>} : memref<8x128xf32, #tpu.memory_space<vmem>>, vector<8x128xf32>,
    } else {
    }
    return
  }
  func.func @transform_0(%arg0: i32) -> (i32, i32) {
    %c0_i32 = arith.constant 0 : i32
    %c0_i32_0 = arith.constant 0 : i32
    return %arg0, %c0_i32 : i32, i32
  }
  func.func @transform_1(%arg0: i32) -> (i32, i32) {
    %c0_i32 = arith.constant 0 : i32
    %c0_i32_0 = arith.constant 0 : i32
    %c0_i32_1 = arith.constant 0 : i32
    return %c0_i32, %c0_i32_0 : i32, i32
  }
  func.func @transform_2(%arg0: i32) -> (i32, i32) {
    %c0_i32 = arith.constant 0 : i32
    %c0_i32_0 = arith.constant 0 : i32
    %c0_i32_1 = arith.constant 0 : i32
    return %c0_i32, %c0_i32_0 : i32, i32
  }
  func.func @transform_3(%arg0: i32) -> (i32, i32) {
    %c0_i32 = arith.constant 0 : i32
    %c0_i32_0 = arith.constant 0 : i32
    %c0_i32_1 = arith.constant 0 : i32
    return %c0_i32, %c0_i32_0 : i32, i32
  }
  func.func @transform_4(%arg0: i32) -> (i32, i32) {
    %c0_i32 = arith.constant 0 : i32
    %c0_i32_0 = arith.constant 0 : i32
    %c0_i32_1 = arith.constant 0 : i32
    return %c0_i32, %c0_i32_0 : i32, i32
  }
}

</mosaic_0001>

<llo_original>
// kernel: model_forward.1
$region0: #{model_forward.1}
  #allocation0 [shape = 'u32[]', space=smem, size = 0x4, offset = 0x4, fixed_abs, tag = 'smem constant byte address 0x4 - core index']
  #allocation1 [shape = 'u32[144,128]{1,0:T(1,128)}', space=vmem, size = 0x12000, scoped, tag = 'internal scratch']
  #allocation2 [shape = 'bf16[8,256]{1,0:T(8,128)(2,1)}', space=vmem, size = 0x1000, scoped, tag = 'scratch operand']
  #allocation3 [shape = 'f32[8,256]{1,0:T(8,128)}', space=vmem, size = 0x2000, scoped, tag = 'scratch operand']
  #allocation4 [shape = 'f32[1,1]{1,0:T(1,128)S(1)}', space=vmem, size = 0x200, scoped, tag = 'scoped memory for model_forward.1']
  %s0 = inlined_call_operand.vmem [shape: f32[64,1024], index: 0, kind: input, shape index: {}]
  %s1 = inlined_call_operand.vmem [shape: bf16[256,1024], index: 1, kind: input, shape index: {}]
  %s2 = inlined_call_operand.vmem [shape: f32[1,256], index: 2, kind: input, shape index: {}]
  %s3 = inlined_call_operand.<no memory space> [shape: f32[1,1], index: 3, kind: input, shape index: {}]
  %s4 = inlined_call_operand.vmem [shape: f32[8,128], index: 4, kind: output, shape index: {}]
  %s5 = sld [smem:[#allocation0]]
  $region34: #{model_forward.1} parent=0
    _
  %s7 = ssub.s32 1, %s5
  %s8 = scalar_select 0, %s7, %s5
  %v9 = vstv %s3
  %10 = vst [vmem:[#allocation4] sm:$0x1] %v9
  // Predicated region
  $region2: #{model_forward.1} parent=0 // pred_check
    _
  $region3: #{model_forward.1} parent=0 // pred_check_branch
    %12 = sbr.rel (0) target = $region5
  $region4: #{model_forward.1} parent=0 // pred_region
    _
  $region5: #{model_forward.1} parent=0 // pred_fallthru
    _
  // Predicated region
  $region6: #{model_forward.1} parent=0 // pred_check
    _
  $region7: #{model_forward.1} parent=0 // pred_check_branch
    %14 = sbr.rel (0) target = $region9
  $region8: #{model_forward.1} parent=0 // pred_region
    _
  $region9: #{model_forward.1} parent=0 // pred_fallthru
    _
  // Predicated region
  $region10: #{model_forward.1} parent=0 // pred_check
    _
  $region11: #{model_forward.1} parent=0 // pred_check_branch
    %16 = sbr.rel (0) target = $region13
  $region12: #{model_forward.1} parent=0 // pred_region
    _
  $region13: #{model_forward.1} parent=0 // pred_fallthru
    _
  // Predicated region
  $region14: #{model_forward.1} parent=0 // pred_check
    _
  $region15: #{model_forward.1} parent=0 // pred_check_branch
    %18 = sbr.rel (0) target = $region17
  $region16: #{model_forward.1} parent=0 // pred_region
    _
  $region17: #{model_forward.1} parent=0 // pred_fallthru
    _
  %p20 = scmp.eq.s32.totalorder 0, 0
  // Predicated region
  $region18: #{model_forward.1} parent=0 // pred_check
    %p21 = pneg %p20
  $region19: #{model_forward.1} parent=0 // pred_check_branch
    %23 = sbr.rel (%p21) target = $region21
  $region20: #{model_forward.1} parent=0 // pred_region
    %24 = vst [vmem:[#allocation2] sm:$0xff] 0
    %25 = vst [vmem:[#allocation3] sm:$0xff] 0.0
    %26 = vst [vmem:[#allocation3 + $0x8] sm:$0xff] 0.0
  $region21: #{model_forward.1} parent=0 // pred_fallthru
    _
  %v27 = vld [vmem:[%s1] sm:$0xff]
  %v28 = vld [vmem:[%s1 + $0x8] sm:$0xff]
  %v29 = vld [vmem:[%s1 + $0x10] sm:$0xff]
  %v30 = vld [vmem:[%s1 + $0x18] sm:$0xff]
  %v31 = vld [vmem:[%s1 + $0x20] sm:$0xff]
  %v32 = vld [vmem:[%s1 + $0x28] sm:$0xff]
  %v33 = vld [vmem:[%s1 + $0x30] sm:$0xff]
  %v34 = vld [vmem:[%s1 + $0x38] sm:$0xff]
  %v35 = vld [vmem:[%s1 + $0x40] sm:$0xff]
  %v36 = vld [vmem:[%s1 + $0x48] sm:$0xff]
  %v37 = vld [vmem:[%s1 + $0x50] sm:$0xff]
  %v38 = vld [vmem:[%s1 + $0x58] sm:$0xff]
  %v39 = vld [vmem:[%s1 + $0x60] sm:$0xff]
  %v40 = vld [vmem:[%s1 + $0x68] sm:$0xff]
  %v41 = vld [vmem:[%s1 + $0x70] sm:$0xff]
  %v42 = vld [vmem:[%s1 + $0x78] sm:$0xff]
  %v43 = vld [vmem:[%s1 + $0x80] sm:$0xff]
  %v44 = vld [vmem:[%s1 + $0x88] sm:$0xff]
  %v45 = vld [vmem:[%s1 + $0x90] sm:$0xff]
  %v46 = vld [vmem:[%s1 + $0x98] sm:$0xff]
  %v47 = vld [vmem:[%s1 + $0xa0] sm:$0xff]
  %v48 = vld [vmem:[%s1 + $0xa8] sm:$0xff]
  %v49 = vld [vmem:[%s1 + $0xb0] sm:$0xff]
  %v50 = vld [vmem:[%s1 + $0xb8] sm:$0xff]
  %v51 = vld [vmem:[%s1 + $0xc0] sm:$0xff]
  %v52 = vld [vmem:[%s1 + $0xc8] sm:$0xff]
  %v53 = vld [vmem:[%s1 + $0xd0] sm:$0xff]
  %v54 = vld [vmem:[%s1 + $0xd8] sm:$0xff]
  %v55 = vld [vmem:[%s1 + $0xe0] sm:$0xff]
  %v56 = vld [vmem:[%s1 + $0xe8] sm:$0xff]
  %v57 = vld [vmem:[%s1 + $0xf0] sm:$0xff]
  %v58 = vld [vmem:[%s1 + $0xf8] sm:$0xff]
  %v59 = vld [vmem:[%s1 + $0x100] sm:$0xff]
  %v60 = vld [vmem:[%s1 + $0x108] sm:$0xff]
  %v61 = vld [vmem:[%s1 + $0x110] sm:$0xff]
  %v62 = vld [vmem:[%s1 + $0x118] sm:$0xff]
  %v63 = vld [vmem:[%s1 + $0x120] sm:$0xff]
  %v64 = vld [vmem:[%s1 + $0x128] sm:$0xff]
  %v65 = vld [vmem:[%s1 + $0x130] sm:$0xff]
  %v66 = vld [vmem:[%s1 + $0x138] sm:$0xff]
  %v67 = vld [vmem:[%s1 + $0x140] sm:$0xff]
  %v68 = vld [vmem:[%s1 + $0x148] sm:$0xff]
  %v69 = vld [vmem:[%s1 + $0x150] sm:$0xff]
  %v70 = vld [vmem:[%s1 + $0x158] sm:$0xff]
  %v71 = vld [vmem:[%s1 + $0x160] sm:$0xff]
  %v72 = vld [vmem:[%s1 + $0x168] sm:$0xff]
  %v73 = vld [vmem:[%s1 + $0x170] sm:$0xff]
  %v74 = vld [vmem:[%s1 + $0x178] sm:$0xff]
  %v75 = vld [vmem:[%s1 + $0x180] sm:$0xff]
  %v76 = vld [vmem:[%s1 + $0x188] sm:$0xff]
  %v77 = vld [vmem:[%s1 + $0x190] sm:$0xff]
  %v78 = vld [vmem:[%s1 + $0x198] sm:$0xff]
  %v79 = vld [vmem:[%s1 + $0x1a0] sm:$0xff]
  %v80 = vld [vmem:[%s1 + $0x1a8] sm:$0xff]
  %v81 = vld [vmem:[%s1 + $0x1b0] sm:$0xff]
  %v82 = vld [vmem:[%s1 + $0x1b8] sm:$0xff]
  %v83 = vld [vmem:[%s1 + $0x1c0] sm:$0xff]
  %v84 = vld [vmem:[%s1 + $0x1c8] sm:$0xff]
  %v85 = vld [vmem:[%s1 + $0x1d0] sm:$0xff]
  %v86 = vld [vmem:[%s1 + $0x1d8] sm:$0xff]
  %v87 = vld [vmem:[%s1 + $0x1e0] sm:$0xff]
  %v88 = vld [vmem:[%s1 + $0x1e8] sm:$0xff]
  %v89 = vld [vmem:[%s1 + $0x1f0] sm:$0xff]
  %v90 = vld [vmem:[%s1 + $0x1f8] sm:$0xff]
  %v91 = vld [vmem:[%s1 + $0x200] sm:$0xff]
  %v92 = vld [vmem:[%s1 + $0x208] sm:$0xff]
  %v93 = vld [vmem:[%s1 + $0x210] sm:$0xff]
  %v94 = vld [vmem:[%s1 + $0x218] sm:$0xff]
  %v95 = vld [vmem:[%s1 + $0x220] sm:$0xff]
  %v96 = vld [vmem:[%s1 + $0x228] sm:$0xff]
  %v97 = vld [vmem:[%s1 + $0x230] sm:$0xff]
  %v98 = vld [vmem:[%s1 + $0x238] sm:$0xff]
  %v99 = vld [vmem:[%s1 + $0x240] sm:$0xff]
  %v100 = vld [vmem:[%s1 + $0x248] sm:$0xff]
  %v101 = vld [vmem:[%s1 + $0x250] sm:$0xff]
  %v102 = vld [vmem:[%s1 + $0x258] sm:$0xff]
  %v103 = vld [vmem:[%s1 + $0x260] sm:$0xff]
  %v104 = vld [vmem:[%s1 + $0x268] sm:$0xff]
  %v105 = vld [vmem:[%s1 + $0x270] sm:$0xff]
  %v106 = vld [vmem:[%s1 + $0x278] sm:$0xff]
  %v107 = vld [vmem:[%s1 + $0x280] sm:$0xff]
  %v108 = vld [vmem:[%s1 + $0x288] sm:$0xff]
  %v109 = vld [vmem:[%s1 + $0x290] sm:$0xff]
  %v110 = vld [vmem:[%s1 + $0x298] sm:$0xff]
  %v111 = vld [vmem:[%s1 + $0x2a0] sm:$0xff]
  %v112 = vld [vmem:[%s1 + $0x2a8] sm:$0xff]
  %v113 = vld [vmem:[%s1 + $0x2b0] sm:$0xff]
  %v114 = vld [vmem:[%s1 + $0x2b8] sm:$0xff]
  %v115 = vld [vmem:[%s1 + $0x2c0] sm:$0xff]
  %v116 = vld [vmem:[%s1 + $0x2c8] sm:$0xff]
  %v117 = vld [vmem:[%s1 + $0x2d0] sm:$0xff]
  %v118 = vld [vmem:[%s1 + $0x2d8] sm:$0xff]
  %v119 = vld [vmem:[%s1 + $0x2e0] sm:$0xff]
  %v120 = vld [vmem:[%s1 + $0x2e8] sm:$0xff]
  %v121 = vld [vmem:[%s1 + $0x2f0] sm:$0xff]
  %v122 = vld [vmem:[%s1 + $0x2f8] sm:$0xff]
  %v123 = vld [vmem:[%s1 + $0x300] sm:$0xff]
  %v124 = vld [vmem:[%s1 + $0x308] sm:$0xff]
  %v125 = vld [vmem:[%s1 + $0x310] sm:$0xff]
  %v126 = vld [vmem:[%s1 + $0x318] sm:$0xff]
  %v127 = vld [vmem:[%s1 + $0x320] sm:$0xff]
  %v128 = vld [vmem:[%s1 + $0x328] sm:$0xff]
  %v129 = vld [vmem:[%s1 + $0x330] sm:$0xff]
  %v130 = vld [vmem:[%s1 + $0x338] sm:$0xff]
  %v131 = vld [vmem:[%s1 + $0x340] sm:$0xff]
  %v132 = vld [vmem:[%s1 + $0x348] sm:$0xff]
  %v133 = vld [vmem:[%s1 + $0x350] sm:$0xff]
  %v134 = vld [vmem:[%s1 + $0x358] sm:$0xff]
  %v135 = vld [vmem:[%s1 + $0x360] sm:$0xff]
  %v136 = vld [vmem:[%s1 + $0x368] sm:$0xff]
  %v137 = vld [vmem:[%s1 + $0x370] sm:$0xff]
  %v138 = vld [vmem:[%s1 + $0x378] sm:$0xff]
  %v139 = vld [vmem:[%s1 + $0x380] sm:$0xff]
  %v140 = vld [vmem:[%s1 + $0x388] sm:$0xff]
  %v141 = vld [vmem:[%s1 + $0x390] sm:$0xff]
  %v142 = vld [vmem:[%s1 + $0x398] sm:$0xff]
  %v143 = vld [vmem:[%s1 + $0x3a0] sm:$0xff]
  %v144 = vld [vmem:[%s1 + $0x3a8] sm:$0xff]
  %v145 = vld [vmem:[%s1 + $0x3b0] sm:$0xff]
  %v146 = vld [vmem:[%s1 + $0x3b8] sm:$0xff]
  %v147 = vld [vmem:[%s1 + $0x3c0] sm:$0xff]
  %v148 = vld [vmem:[%s1 + $0x3c8] sm:$0xff]
  %v149 = vld [vmem:[%s1 + $0x3d0] sm:$0xff]
  %v150 = vld [vmem:[%s1 + $0x3d8] sm:$0xff]
  %v151 = vld [vmem:[%s1 + $0x3e0] sm:$0xff]
  %v152 = vld [vmem:[%s1 + $0x3e8] sm:$0xff]
  %v153 = vld [vmem:[%s1 + $0x3f0] sm:$0xff]
  %v154 = vld [vmem:[%s1 + $0x3f8] sm:$0xff]
  %v155 = vld [vmem:[#allocation2] sm:$0xff]
  %v156 = vld [vmem:[#allocation3] sm:$0xff]
  %v157 = vld [vmem:[#allocation3 + $0x8] sm:$0xff]
  %s158 = smul.u32 0, 8
  %s159 = smul.addr %s158, 8
  %s160 = scalar_lea.vmem %s0, %s159
  %v161 = vld [vmem:[%s160] sm:$0xff]
  %v162 = vld [vmem:[%s160 + $0x8] sm:$0xff]
  %v163 = vld [vmem:[%s160 + $0x10] sm:$0xff]
  %v164 = vld [vmem:[%s160 + $0x18] sm:$0xff]
  %v165 = vld [vmem:[%s160 + $0x20] sm:$0xff]
  %v166 = vld [vmem:[%s160 + $0x28] sm:$0xff]
  %v167 = vld [vmem:[%s160 + $0x30] sm:$0xff]
  %v168 = vld [vmem:[%s160 + $0x38] sm:$0xff]
  %v170 = vunpack.c.l.b16 %v155
  %v171 = vunpack.c.h.b16 %v155
  %v172 = vpack.c.b16 %v170, %v170
  %v173 = vpack.c.b16 %v171, %v171
  %v304 = vunpack.c.l.b16 %v27
  %v305 = vunpack.c.h.b16 %v27
  %v306 = vunpack.c.l.b16 %v28
  %v307 = vunpack.c.h.b16 %v28
  %v308 = vunpack.c.l.b16 %v29
  %v309 = vunpack.c.h.b16 %v29
  %v310 = vunpack.c.l.b16 %v30
  %v311 = vunpack.c.h.b16 %v30
  %v312 = vunpack.c.l.b16 %v31
  %v313 = vunpack.c.h.b16 %v31
  %v314 = vunpack.c.l.b16 %v32
  %v315 = vunpack.c.h.b16 %v32
  %v316 = vunpack.c.l.b16 %v33
  %v317 = vunpack.c.h.b16 %v33
  %v318 = vunpack.c.l.b16 %v34
  %v319 = vunpack.c.h.b16 %v34
  %v320 = vunpack.c.l.b16 %v35
  %v321 = vunpack.c.h.b16 %v35
  %v322 = vunpack.c.l.b16 %v36
  %v323 = vunpack.c.h.b16 %v36
  %v324 = vunpack.c.l.b16 %v37
  %v325 = vunpack.c.h.b16 %v37
  %v326 = vunpack.c.l.b16 %v38
  %v327 = vunpack.c.h.b16 %v38
  %v328 = vunpack.c.l.b16 %v39
  %v329 = vunpack.c.h.b16 %v39
  %v330 = vunpack.c.l.b16 %v40
  %v331 = vunpack.c.h.b16 %v40
  %v332 = vunpack.c.l.b16 %v41
  %v333 = vunpack.c.h.b16 %v41
  %v334 = vunpack.c.l.b16 %v42
  %v335 = vunpack.c.h.b16 %v42
  %v336 = vunpack.c.l.b16 %v43
  %v337 = vunpack.c.h.b16 %v43
  %v338 = vunpack.c.l.b16 %v44
  %v339 = vunpack.c.h.b16 %v44
  %v340 = vunpack.c.l.b16 %v45
  %v341 = vunpack.c.h.b16 %v45
  %v342 = vunpack.c.l.b16 %v46
  %v343 = vunpack.c.h.b16 %v46
  %v344 = vunpack.c.l.b16 %v47
  %v345 = vunpack.c.h.b16 %v47
  %v346 = vunpack.c.l.b16 %v48
  %v347 = vunpack.c.h.b16 %v48
  %v348 = vunpack.c.l.b16 %v49
  %v349 = vunpack.c.h.b16 %v49
  %v350 = vunpack.c.l.b16 %v50
  %v351 = vunpack.c.h.b16 %v50
  %v352 = vunpack.c.l.b16 %v51
  %v353 = vunpack.c.h.b16 %v51
  %v354 = vunpack.c.l.b16 %v52
  %v355 = vunpack.c.h.b16 %v52
  %v356 = vunpack.c.l.b16 %v53
  %v357 = vunpack.c.h.b16 %v53
  %v358 = vunpack.c.l.b16 %v54
  %v359 = vunpack.c.h.b16 %v54
  %v360 = vunpack.c.l.b16 %v55
  %v361 = vunpack.c.h.b16 %v55
  %v362 = vunpack.c.l.b16 %v56
  %v363 = vunpack.c.h.b16 %v56
  %v364 = vunpack.c.l.b16 %v57
  %v365 = vunpack.c.h.b16 %v57
  %v366 = vunpack.c.l.b16 %v58
  %v367 = vunpack.c.h.b16 %v58
  %v368 = vunpack.c.l.b16 %v59
  %v369 = vunpack.c.h.b16 %v59
  %v370 = vunpack.c.l.b16 %v60
  %v371 = vunpack.c.h.b16 %v60
  %v372 = vunpack.c.l.b16 %v61
  %v373 = vunpack.c.h.b16 %v61
  %v374 = vunpack.c.l.b16 %v62
  %v375 = vunpack.c.h.b16 %v62
  %v376 = vunpack.c.l.b16 %v63
  %v377 = vunpack.c.h.b16 %v63
  %v378 = vunpack.c.l.b16 %v64
  %v379 = vunpack.c.h.b16 %v64
  %v380 = vunpack.c.l.b16 %v65
  %v381 = vunpack.c.h.b16 %v65
  %v382 = vunpack.c.l.b16 %v66
  %v383 = vunpack.c.h.b16 %v66
  %v384 = vunpack.c.l.b16 %v67
  %v385 = vunpack.c.h.b16 %v67
  %v386 = vunpack.c.l.b16 %v68
  %v387 = vunpack.c.h.b16 %v68
  %v388 = vunpack.c.l.b16 %v69
  %v389 = vunpack.c.h.b16 %v69
  %v390 = vunpack.c.l.b16 %v70
  %v391 = vunpack.c.h.b16 %v70
  %v392 = vunpack.c.l.b16 %v71
  %v393 = vunpack.c.h.b16 %v71
  %v394 = vunpack.c.l.b16 %v72
  %v395 = vunpack.c.h.b16 %v72
  %v396 = vunpack.c.l.b16 %v73
  %v397 = vunpack.c.h.b16 %v73
  %v398 = vunpack.c.l.b16 %v74
  %v399 = vunpack.c.h.b16 %v74
  %v400 = vunpack.c.l.b16 %v75
  %v401 = vunpack.c.h.b16 %v75
  %v402 = vunpack.c.l.b16 %v76
  %v403 = vunpack.c.h.b16 %v76
  %v404 = vunpack.c.l.b16 %v77
  %v405 = vunpack.c.h.b16 %v77
  %v406 = vunpack.c.l.b16 %v78
  %v407 = vunpack.c.h.b16 %v78
  %v408 = vunpack.c.l.b16 %v79
  %v409 = vunpack.c.h.b16 %v79
  %v410 = vunpack.c.l.b16 %v80
  %v411 = vunpack.c.h.b16 %v80
  %v412 = vunpack.c.l.b16 %v81
  %v413 = vunpack.c.h.b16 %v81
  %v414 = vunpack.c.l.b16 %v82
  %v415 = vunpack.c.h.b16 %v82
  %v416 = vunpack.c.l.b16 %v83
  %v417 = vunpack.c.h.b16 %v83
  %v418 = vunpack.c.l.b16 %v84
  %v419 = vunpack.c.h.b16 %v84
  %v420 = vunpack.c.l.b16 %v85
  %v421 = vunpack.c.h.b16 %v85
  %v422 = vunpack.c.l.b16 %v86
  %v423 = vunpack.c.h.b16 %v86
  %v424 = vunpack.c.l.b16 %v87
  %v425 = vunpack.c.h.b16 %v87
  %v426 = vunpack.c.l.b16 %v88
  %v427 = vunpack.c.h.b16 %v88
  %v428 = vunpack.c.l.b16 %v89
  %v429 = vunpack.c.h.b16 %v89
  %v430 = vunpack.c.l.b16 %v90
  %v431 = vunpack.c.h.b16 %v90
  %v432 = vunpack.c.l.b16 %v91
  %v433 = vunpack.c.h.b16 %v91
  %v434 = vunpack.c.l.b16 %v92
  %v435 = vunpack.c.h.b16 %v92
  %v436 = vunpack.c.l.b16 %v93
  %v437 = vunpack.c.h.b16 %v93
  %v438 = vunpack.c.l.b16 %v94
  %v439 = vunpack.c.h.b16 %v94
  %v440 = vunpack.c.l.b16 %v95
  %v441 = vunpack.c.h.b16 %v95
  %v442 = vunpack.c.l.b16 %v96
  %v443 = vunpack.c.h.b16 %v96
  %v444 = vunpack.c.l.b16 %v97
  %v445 = vunpack.c.h.b16 %v97
  %v446 = vunpack.c.l.b16 %v98
  %v447 = vunpack.c.h.b16 %v98
  %v448 = vunpack.c.l.b16 %v99
  %v449 = vunpack.c.h.b16 %v99
  %v450 = vunpack.c.l.b16 %v100
  %v451 = vunpack.c.h.b16 %v100
  %v452 = vunpack.c.l.b16 %v101
  %v453 = vunpack.c.h.b16 %v101
  %v454 = vunpack.c.l.b16 %v102
  %v455 = vunpack.c.h.b16 %v102
  %v456 = vunpack.c.l.b16 %v103
  %v457 = vunpack.c.h.b16 %v103
  %v458 = vunpack.c.l.b16 %v104
  %v459 = vunpack.c.h.b16 %v104
  %v460 = vunpack.c.l.b16 %v105
  %v461 = vunpack.c.h.b16 %v105
  %v462 = vunpack.c.l.b16 %v106
  %v463 = vunpack.c.h.b16 %v106
  %v464 = vunpack.c.l.b16 %v107
  %v465 = vunpack.c.h.b16 %v107
  %v466 = vunpack.c.l.b16 %v108
  %v467 = vunpack.c.h.b16 %v108
  %v468 = vunpack.c.l.b16 %v109
  %v469 = vunpack.c.h.b16 %v109
  %v470 = vunpack.c.l.b16 %v110
  %v471 = vunpack.c.h.b16 %v110
  %v472 = vunpack.c.l.b16 %v111
  %v473 = vunpack.c.h.b16 %v111
  %v474 = vunpack.c.l.b16 %v112
  %v475 = vunpack.c.h.b16 %v112
  %v476 = vunpack.c.l.b16 %v113
  %v477 = vunpack.c.h.b16 %v113
  %v478 = vunpack.c.l.b16 %v114
  %v479 = vunpack.c.h.b16 %v114
  %v480 = vunpack.c.l.b16 %v115
  %v481 = vunpack.c.h.b16 %v115
  %v482 = vunpack.c.l.b16 %v116
  %v483 = vunpack.c.h.b16 %v116
  %v484 = vunpack.c.l.b16 %v117
  %v485 = vunpack.c.h.b16 %v117
  %v486 = vunpack.c.l.b16 %v118
  %v487 = vunpack.c.h.b16 %v118
  %v488 = vunpack.c.l.b16 %v119
  %v489 = vunpack.c.h.b16 %v119
  %v490 = vunpack.c.l.b16 %v120
  %v491 = vunpack.c.h.b16 %v120
  %v492 = vunpack.c.l.b16 %v121
  %v493 = vunpack.c.h.b16 %v121
  %v494 = vunpack.c.l.b16 %v122
  %v495 = vunpack.c.h.b16 %v122
  %v496 = vunpack.c.l.b16 %v123
  %v497 = vunpack.c.h.b16 %v123
  %v498 = vunpack.c.l.b16 %v124
  %v499 = vunpack.c.h.b16 %v124
  %v500 = vunpack.c.l.b16 %v125
  %v501 = vunpack.c.h.b16 %v125
  %v502 = vunpack.c.l.b16 %v126
  %v503 = vunpack.c.h.b16 %v126
  %v504 = vunpack.c.l.b16 %v127
  %v505 = vunpack.c.h.b16 %v127
  %v506 = vunpack.c.l.b16 %v128
  %v507 = vunpack.c.h.b16 %v128
  %v508 = vunpack.c.l.b16 %v129
  %v509 = vunpack.c.h.b16 %v129
  %v510 = vunpack.c.l.b16 %v130
  %v511 = vunpack.c.h.b16 %v130
  %v512 = vunpack.c.l.b16 %v131
  %v513 = vunpack.c.h.b16 %v131
  %v514 = vunpack.c.l.b16 %v132
  %v515 = vunpack.c.h.b16 %v132
  %v516 = vunpack.c.l.b16 %v133
  %v517 = vunpack.c.h.b16 %v133
  %v518 = vunpack.c.l.b16 %v134
  %v519 = vunpack.c.h.b16 %v134
  %v520 = vunpack.c.l.b16 %v135
  %v521 = vunpack.c.h.b16 %v135
  %v522 = vunpack.c.l.b16 %v136
  %v523 = vunpack.c.h.b16 %v136
  %v524 = vunpack.c.l.b16 %v137
  %v525 = vunpack.c.h.b16 %v137
  %v526 = vunpack.c.l.b16 %v138
  %v527 = vunpack.c.h.b16 %v138
  %v528 = vunpack.c.l.b16 %v139
  %v529 = vunpack.c.h.b16 %v139
  %v530 = vunpack.c.l.b16 %v140
  %v531 = vunpack.c.h.b16 %v140
  %v532 = vunpack.c.l.b16 %v141
  %v533 = vunpack.c.h.b16 %v141
  %v534 = vunpack.c.l.b16 %v142
  %v535 = vunpack.c.h.b16 %v142
  %v536 = vunpack.c.l.b16 %v143
  %v537 = vunpack.c.h.b16 %v143
  %v538 = vunpack.c.l.b16 %v144
  %v539 = vunpack.c.h.b16 %v144
  %v540 = vunpack.c.l.b16 %v145
  %v541 = vunpack.c.h.b16 %v145
  %v542 = vunpack.c.l.b16 %v146
  %v543 = vunpack.c.h.b16 %v146
  %v544 = vunpack.c.l.b16 %v147
  %v545 = vunpack.c.h.b16 %v147
  %v546 = vunpack.c.l.b16 %v148
  %v547 = vunpack.c.h.b16 %v148
  %v548 = vunpack.c.l.b16 %v149
  %v549 = vunpack.c.h.b16 %v149
  %v550 = vunpack.c.l.b16 %v150
  %v551 = vunpack.c.h.b16 %v150
  %v552 = vunpack.c.l.b16 %v151
  %v553 = vunpack.c.h.b16 %v151
  %v554 = vunpack.c.l.b16 %v152
  %v555 = vunpack.c.h.b16 %v152
  %v556 = vunpack.c.l.b16 %v153
  %v557 = vunpack.c.h.b16 %v153
  %v558 = vunpack.c.l.b16 %v154
  %v559 = vunpack.c.h.b16 %v154
  %v560 = vpack.c.b16 %v312, %v304
  %v561 = vpack.c.b16 %v313, %v305
  %v562 = vpack.c.b16 %v314, %v306
  %v563 = vpack.c.b16 %v315, %v307
  %v564 = vpack.c.b16 %v316, %v308
  %v565 = vpack.c.b16 %v317, %v309
  %v566 = vpack.c.b16 %v318, %v310
  %v567 = vpack.c.b16 %v319, %v311
  %v568 = vpack.c.b16 %v328, %v320
  %v569 = vpack.c.b16 %v329, %v321
  %v570 = vpack.c.b16 %v330, %v322
  %v571 = vpack.c.b16 %v331, %v323
  %v572 = vpack.c.b16 %v332, %v324
  %v573 = vpack.c.b16 %v333, %v325
  %v574 = vpack.c.b16 %v334, %v326
  %v575 = vpack.c.b16 %v335, %v327
  %v576 = vpack.c.b16 %v344, %v336
  %v577 = vpack.c.b16 %v345, %v337
  %v578 = vpack.c.b16 %v346, %v338
  %v579 = vpack.c.b16 %v347, %v339
  %v580 = vpack.c.b16 %v348, %v340
  %v581 = vpack.c.b16 %v349, %v341
  %v582 = vpack.c.b16 %v350, %v342
  %v583 = vpack.c.b16 %v351, %v343
  %v584 = vpack.c.b16 %v360, %v352
  %v585 = vpack.c.b16 %v361, %v353
  %v586 = vpack.c.b16 %v362, %v354
  %v587 = vpack.c.b16 %v363, %v355
  %v588 = vpack.c.b16 %v364, %v356
  %v589 = vpack.c.b16 %v365, %v357
  %v590 = vpack.c.b16 %v366, %v358
  %v591 = vpack.c.b16 %v367, %v359
  %v592 = vpack.c.b16 %v376, %v368
  %v593 = vpack.c.b16 %v377, %v369
  %v594 = vpack.c.b16 %v378, %v370
  %v595 = vpack.c.b16 %v379, %v371
  %v596 = vpack.c.b16 %v380, %v372
  %v597 = vpack.c.b16 %v381, %v373
  %v598 = vpack.c.b16 %v382, %v374
  %v599 = vpack.c.b16 %v383, %v375
  %v600 = vpack.c.b16 %v392, %v384
  %v601 = vpack.c.b16 %v393, %v385
  %v602 = vpack.c.b16 %v394, %v386
  %v603 = vpack.c.b16 %v395, %v387
  %v604 = vpack.c.b16 %v396, %v388
  %v605 = vpack.c.b16 %v397, %v389
  %v606 = vpack.c.b16 %v398, %v390
  %v607 = vpack.c.b16 %v399, %v391
  %v608 = vpack.c.b16 %v408, %v400
  %v609 = vpack.c.b16 %v409, %v401
  %v610 = vpack.c.b16 %v410, %v402
  %v611 = vpack.c.b16 %v411, %v403
  %v612 = vpack.c.b16 %v412, %v404
  %v613 = vpack.c.b16 %v413, %v405
  %v614 = vpack.c.b16 %v414, %v406
  %v615 = vpack.c.b16 %v415, %v407
  %v616 = vpack.c.b16 %v424, %v416
  %v617 = vpack.c.b16 %v425, %v417
  %v618 = vpack.c.b16 %v426, %v418
  %v619 = vpack.c.b16 %v427, %v419
  %v620 = vpack.c.b16 %v428, %v420
  %v621 = vpack.c.b16 %v429, %v421
  %v622 = vpack.c.b16 %v430, %v422
  %v623 = vpack.c.b16 %v431, %v423
  %v624 = vpack.c.b16 %v440, %v432
  %v625 = vpack.c.b16 %v441, %v433
  %v626 = vpack.c.b16 %v442, %v434
  %v627 = vpack.c.b16 %v443, %v435
  %v628 = vpack.c.b16 %v444, %v436
  %v629 = vpack.c.b16 %v445, %v437
  %v630 = vpack.c.b16 %v446, %v438
  %v631 = vpack.c.b16 %v447, %v439
  %v632 = vpack.c.b16 %v456, %v448
  %v633 = vpack.c.b16 %v457, %v449
  %v634 = vpack.c.b16 %v458, %v450
  %v635 = vpack.c.b16 %v459, %v451
  %v636 = vpack.c.b16 %v460, %v452
  %v637 = vpack.c.b16 %v461, %v453
  %v638 = vpack.c.b16 %v462, %v454
  %v639 = vpack.c.b16 %v463, %v455
  %v640 = vpack.c.b16 %v472, %v464
  %v641 = vpack.c.b16 %v473, %v465
  %v642 = vpack.c.b16 %v474, %v466
  %v643 = vpack.c.b16 %v475, %v467
  %v644 = vpack.c.b16 %v476, %v468
  %v645 = vpack.c.b16 %v477, %v469
  %v646 = vpack.c.b16 %v478, %v470
  %v647 = vpack.c.b16 %v479, %v471
  %v648 = vpack.c.b16 %v488, %v480
  %v649 = vpack.c.b16 %v489, %v481
  %v650 = vpack.c.b16 %v490, %v482
  %v651 = vpack.c.b16 %v491, %v483
  %v652 = vpack.c.b16 %v492, %v484
  %v653 = vpack.c.b16 %v493, %v485
  %v654 = vpack.c.b16 %v494, %v486
  %v655 = vpack.c.b16 %v495, %v487
  %v656 = vpack.c.b16 %v504, %v496
  %v657 = vpack.c.b16 %v505, %v497
  %v658 = vpack.c.b16 %v506, %v498
  %v659 = vpack.c.b16 %v507, %v499
  %v660 = vpack.c.b16 %v508, %v500
  %v661 = vpack.c.b16 %v509, %v501
  %v662 = vpack.c.b16 %v510, %v502
  %v663 = vpack.c.b16 %v511, %v503
  %v664 = vpack.c.b16 %v520, %v512
  %v665 = vpack.c.b16 %v521, %v513
  %v666 = vpack.c.b16 %v522, %v514
  %v667 = vpack.c.b16 %v523, %v515
  %v668 = vpack.c.b16 %v524, %v516
  %v669 = vpack.c.b16 %v525, %v517
  %v670 = vpack.c.b16 %v526, %v518
  %v671 = vpack.c.b16 %v527, %v519
  %v672 = vpack.c.b16 %v536, %v528
  %v673 = vpack.c.b16 %v537, %v529
  %v674 = vpack.c.b16 %v538, %v530
  %v675 = vpack.c.b16 %v539, %v531
  %v676 = vpack.c.b16 %v540, %v532
  %v677 = vpack.c.b16 %v541, %v533
  %v678 = vpack.c.b16 %v542, %v534
  %v679 = vpack.c.b16 %v543, %v535
  %v680 = vpack.c.b16 %v552, %v544
  %v681 = vpack.c.b16 %v553, %v545
  %v682 = vpack.c.b16 %v554, %v546
  %v683 = vpack.c.b16 %v555, %v547
  %v684 = vpack.c.b16 %v556, %v548
  %v685 = vpack.c.b16 %v557, %v549
  %v686 = vpack.c.b16 %v558, %v550
  %v687 = vpack.c.b16 %v559, %v551
  %816 = vmatprep.subr.bf16.mxu0 %v561
  %817 = vmatpush1.bf16.msra.mxu0 %v560
  %818 = vmatprep.subr.bf16.mxu0 %v569
  %819 = vmatpush1.bf16.msra.mxu0 %v568
  %820 = vmatprep.subr.bf16.mxu0 %v577
  %821 = vmatpush1.bf16.msra.mxu0 %v576
  %822 = vmatprep.subr.bf16.mxu0 %v585
  %823 = vmatpush1.bf16.msra.mxu0 %v584
  %824 = vmatprep.subr.bf16.mxu0 %v593
  %825 = vmatpush1.bf16.msra.mxu0 %v592
  %826 = vmatprep.subr.bf16.mxu0 %v601
  %827 = vmatpush1.bf16.msra.mxu0 %v600
  %828 = vmatprep.subr.bf16.mxu0 %v609
  %829 = vmatpush1.bf16.msra.mxu0 %v608
  %830 = vmatprep.subr.bf16.mxu0 %v617
  %831 = vmatpush1.bf16.msra.mxu0 %v616
  %832 = vmatprep.subr.bf16.mxu0 %v625
  %833 = vmatpush1.bf16.msra.mxu0 %v624
  %834 = vmatprep.subr.bf16.mxu0 %v633
  %835 = vmatpush1.bf16.msra.mxu0 %v632
  %836 = vmatprep.subr.bf16.mxu0 %v641
  %837 = vmatpush1.bf16.msra.mxu0 %v640
  %838 = vmatprep.subr.bf16.mxu0 %v649
  %839 = vmatpush1.bf16.msra.mxu0 %v648
  %840 = vmatprep.subr.bf16.mxu0 %v657
  %841 = vmatpush1.bf16.msra.mxu0 %v656
  %842 = vmatprep.subr.bf16.mxu0 %v665
  %843 = vmatpush1.bf16.msra.mxu0 %v664
  %844 = vmatprep.subr.bf16.mxu0 %v673
  %845 = vmatpush1.bf16.msra.mxu0 %v672
  %846 = vmatprep.subr.bf16.mxu0 %v681
  %847 = vmatpush1.bf16.msra.mxu0 %v680
  %848 = vmatprep.mubr.bf16.mxu0 %v173
  %849 = vmatmul.mubr.bf16.gmra.mrb[0].mxu0 %v172
  %v850 = vpop.f32.mrb[0].mxu0
  %v851 = vadd.f32 0.0, %v850
  %v852 = vpop.f32.mrb[0].mxu0
  %v853 = vadd.f32 0.0, %v852
  %v854 = vpop.f32.mrb[0].mxu0
  %v855 = vpop.f32.mrb[0].mxu0
  %856 = vdwg.mxu0
  %857 = vmatprep.subr.bf16.mxu0 %v563
  %858 = vmatpush1.bf16.msra.mxu0 %v562
  %859 = vmatprep.subr.bf16.mxu0 %v571
  %860 = vmatpush1.bf16.msra.mxu0 %v570
  %861 = vmatprep.subr.bf16.mxu0 %v579
  %862 = vmatpush1.bf16.msra.mxu0 %v578
  %863 = vmatprep.subr.bf16.mxu0 %v587
  %864 = vmatpush1.bf16.msra.mxu0 %v586
  %865 = vmatprep.subr.bf16.mxu0 %v595
  %866 = vmatpush1.bf16.msra.mxu0 %v594
  %867 = vmatprep.subr.bf16.mxu0 %v603
  %868 = vmatpush1.bf16.msra.mxu0 %v602
  %869 = vmatprep.subr.bf16.mxu0 %v611
  %870 = vmatpush1.bf16.msra.mxu0 %v610
  %871 = vmatprep.subr.bf16.mxu0 %v619
  %872 = vmatpush1.bf16.msra.mxu0 %v618
  %873 = vmatprep.subr.bf16.mxu0 %v627
  %874 = vmatpush1.bf16.msra.mxu0 %v626
  %875 = vmatprep.subr.bf16.mxu0 %v635
  %876 = vmatpush1.bf16.msra.mxu0 %v634
  %877 = vmatprep.subr.bf16.mxu0 %v643
  %878 = vmatpush1.bf16.msra.mxu0 %v642
  %879 = vmatprep.subr.bf16.mxu0 %v651
  %880 = vmatpush1.bf16.msra.mxu0 %v650
  %881 = vmatprep.subr.bf16.mxu0 %v659
  %882 = vmatpush1.bf16.msra.mxu0 %v658
  %883 = vmatprep.subr.bf16.mxu0 %v667
  %884 = vmatpush1.bf16.msra.mxu0 %v666
  %885 = vmatprep.subr.bf16.mxu0 %v675
  %886 = vmatpush1.bf16.msra.mxu0 %v674
  %887 = vmatprep.subr.bf16.mxu0 %v683
  %888 = vmatpush1.bf16.msra.mxu0 %v682
  %889 = vmatprep.mubr.bf16.mxu0 %v173
  %890 = vmatmul.mubr.bf16.gmra.mrb[0].mxu0 %v172
  %v891 = vpop.f32.mrb[0].mxu0
  %v892 = vadd.f32 0.0, %v891
  %v893 = vpop.f32.mrb[0].mxu0
  %v894 = vadd.f32 0.0, %v893
  %v895 = vpop.f32.mrb[0].mxu0
  %v896 = vpop.f32.mrb[0].mxu0
  %897 = vdwg.mxu0
  %898 = vmatprep.subr.bf16.mxu0 %v565
  %899 = vmatpush1.bf16.msra.mxu0 %v564
  %900 = vmatprep.subr.bf16.mxu0 %v573
  %901 = vmatpush1.bf16.msra.mxu0 %v572
  %902 = vmatprep.subr.bf16.mxu0 %v581
  %903 = vmatpush1.bf16.msra.mxu0 %v580
  %904 = vmatprep.subr.bf16.mxu0 %v589
  %905 = vmatpush1.bf16.msra.mxu0 %v588
  %906 = vmatprep.subr.bf16.mxu0 %v597
  %907 = vmatpush1.bf16.msra.mxu0 %v596
  %908 = vmatprep.subr.bf16.mxu0 %v605
  %909 = vmatpush1.bf16.msra.mxu0 %v604
  %910 = vmatprep.subr.bf16.mxu0 %v613
  %911 = vmatpush1.bf16.msra.mxu0 %v612
  %912 = vmatprep.subr.bf16.mxu0 %v621
  %913 = vmatpush1.bf16.msra.mxu0 %v620
  %914 = vmatprep.subr.bf16.mxu0 %v629
  %915 = vmatpush1.bf16.msra.mxu0 %v628
  %916 = vmatprep.subr.bf16.mxu0 %v637
  %917 = vmatpush1.bf16.msra.mxu0 %v636
  %918 = vmatprep.subr.bf16.mxu0 %v645
  %919 = vmatpush1.bf16.msra.mxu0 %v644
  %920 = vmatprep.subr.bf16.mxu0 %v653
  %921 = vmatpush1.bf16.msra.mxu0 %v652
  %922 = vmatprep.subr.bf16.mxu0 %v661
  %923 = vmatpush1.bf16.msra.mxu0 %v660
  %924 = vmatprep.subr.bf16.mxu0 %v669
  %925 = vmatpush1.bf16.msra.mxu0 %v668
  %926 = vmatprep.subr.bf16.mxu0 %v677
  %927 = vmatpush1.bf16.msra.mxu0 %v676
  %928 = vmatprep.subr.bf16.mxu0 %v685
  %929 = vmatpush1.bf16.msra.mxu0 %v684
  %930 = vmatprep.mubr.bf16.mxu0 %v173
  %931 = vmatmul.mubr.bf16.gmra.mrb[0].mxu0 %v172
  %v932 = vpop.f32.mrb[0].mxu0
  %v933 = vadd.f32 0.0, %v932
  %v934 = vpop.f32.mrb[0].mxu0
  %v935 = vadd.f32 0.0, %v934
  %v936 = vpop.f32.mrb[0].mxu0
  %v937 = vpop.f32.mrb[0].mxu0
  %938 = vdwg.mxu0
  %939 = vmatprep.subr.bf16.mxu0 %v567
  %940 = vmatpush1.bf16.msra.mxu0 %v566
  %941 = vmatprep.subr.bf16.mxu0 %v575
  %942 = vmatpush1.bf16.msra.mxu0 %v574
  %943 = vmatprep.subr.bf16.mxu0 %v583
  %944 = vmatpush1.bf16.msra.mxu0 %v582
  %945 = vmatprep.subr.bf16.mxu0 %v591
  %946 = vmatpush1.bf16.msra.mxu0 %v590
  %947 = vmatprep.subr.bf16.mxu0 %v599
  %948 = vmatpush1.bf16.msra.mxu0 %v598
  %949 = vmatprep.subr.bf16.mxu0 %v607
  %950 = vmatpush1.bf16.msra.mxu0 %v606
  %951 = vmatprep.subr.bf16.mxu0 %v615
  %952 = vmatpush1.bf16.msra.mxu0 %v614
  %953 = vmatprep.subr.bf16.mxu0 %v623
  %954 = vmatpush1.bf16.msra.mxu0 %v622
  %955 = vmatprep.subr.bf16.mxu0 %v631
  %956 = vmatpush1.bf16.msra.mxu0 %v630
  %957 = vmatprep.subr.bf16.mxu0 %v639
  %958 = vmatpush1.bf16.msra.mxu0 %v638
  %959 = vmatprep.subr.bf16.mxu0 %v647
  %960 = vmatpush1.bf16.msra.mxu0 %v646
  %961 = vmatprep.subr.bf16.mxu0 %v655
  %962 = vmatpush1.bf16.msra.mxu0 %v654
  %963 = vmatprep.subr.bf16.mxu0 %v663
  %964 = vmatpush1.bf16.msra.mxu0 %v662
  %965 = vmatprep.subr.bf16.mxu0 %v671
  %966 = vmatpush1.bf16.msra.mxu0 %v670
  %967 = vmatprep.subr.bf16.mxu0 %v679
  %968 = vmatpush1.bf16.msra.mxu0 %v678
  %969 = vmatprep.subr.bf16.mxu0 %v687
  %970 = vmatpush1.bf16.msra.mxu0 %v686
  %971 = vmatprep.mubr.bf16.mxu0 %v173
  %972 = vmatmul.mubr.bf16.gmra.mrb[0].mxu0 %v172
  %v973 = vpop.f32.mrb[0].mxu0
  %v974 = vadd.f32 0.0, %v973
  %v975 = vpop.f32.mrb[0].mxu0
  %v976 = vadd.f32 0.0, %v975
  %v977 = vpop.f32.mrb[0].mxu0
  %v978 = vpop.f32.mrb[0].mxu0
  %979 = vdwg.mxu0
  %v980 = vadd.f32 %v161, %v851
  %v981 = vadd.f32 %v162, %v853
  %v982 = vadd.f32 %v163, %v892
  %v983 = vadd.f32 %v164, %v894
  %v984 = vadd.f32 %v165, %v933
  %v985 = vadd.f32 %v166, %v935
  %v986 = vadd.f32 %v167, %v974
  %v987 = vadd.f32 %v168, %v976
  %v988 = vxor.u32 %v980, 2147483648
  %v989 = vxor.u32 %v981, 2147483648
  %v990 = vxor.u32 %v982, 2147483648
  %v991 = vxor.u32 %v983, 2147483648
  %v992 = vxor.u32 %v984, 2147483648
  %v993 = vxor.u32 %v985, 2147483648
  %v994 = vmul.f32 %v988, 1.442695
  %v995 = vpow.pop %v994
  %v996 = vmul.f32 %v989, 1.442695
  %v997 = vpow.pop %v996
  %v998 = vmul.f32 %v990, 1.442695
  %v999 = vpow.pop %v998
  %v1000 = vmul.f32 %v991, 1.442695
  %v1001 = vpow.pop %v1000
  %v1002 = vmul.f32 %v992, 1.442695
  %v1003 = vpow.pop %v1002
  %v1004 = vmul.f32 %v993, 1.442695
  %v1005 = vpow.pop %v1004
  %v1006 = vadd.f32 %v995, 1.0
  %v1007 = vadd.f32 %v997, 1.0
  %v1008 = vadd.f32 %v999, 1.0
  %v1009 = vadd.f32 %v1001, 1.0
  %v1010 = vadd.f32 %v1003, 1.0
  %v1011 = vadd.f32 %v1005, 1.0
  %v1012 = vrcp.pop %v1006
  %v1013 = vmul.f32 1.0, %v1012
  %v1014 = vrcp.pop %v1007
  %v1015 = vmul.f32 1.0, %v1014
  %v1016 = vrcp.pop %v1008
  %v1017 = vmul.f32 1.0, %v1016
  %v1018 = vrcp.pop %v1009
  %v1019 = vmul.f32 1.0, %v1018
  %v1020 = vrcp.pop %v1010
  %v1021 = vmul.f32 1.0, %v1020
  %v1022 = vrcp.pop %v1011
  %v1023 = vmul.f32 1.0, %v1022
  %v1024 = vtanh.pop %v986
  %v1025 = vtanh.pop %v987
  %v1026 = vmul.f32 %v1017, %v156
  %v1027 = vmul.f32 %v1019, %v157
  %v1028 = vmul.f32 %v1013, %v1024
  %v1029 = vmul.f32 %v1015, %v1025
  %v1030 = vadd.f32 %v1026, %v1028
  %v1031 = vadd.f32 %v1027, %v1029
  %v1032 = vtanh.pop %v1030
  %v1033 = vtanh.pop %v1031
  %v1034 = vmul.f32 %v1021, %v1032
  %v1035 = vmul.f32 %v1023, %v1033
  %v1036 = vpack.c.bf16 %v1034, %v1034
  %v1037 = vpack.c.bf16 %v1035, %v1035
  %s1038 = smul.u32 1, 8
  %s1039 = smul.addr %s1038, 8
  %s1040 = scalar_lea.vmem %s0, %s1039
  %v1041 = vld [vmem:[%s1040] sm:$0xff]
  %v1042 = vld [vmem:[%s1040 + $0x8] sm:$0xff]
  %v1043 = vld [vmem:[%s1040 + $0x10] sm:$0xff]
  %v1044 = vld [vmem:[%s1040 + $0x18] sm:$0xff]
  %v1045 = vld [vmem:[%s1040 + $0x20] sm:$0xff]
  %v1046 = vld [vmem:[%s1040 + $0x28] sm:$0xff]
  %v1047 = vld [vmem:[%s1040 + $0x30] sm:$0xff]
  %v1048 = vld [vmem:[%s1040 + $0x38] sm:$0xff]
  %1049 = vmatprep.subr.bf16.mxu0 %v561
  %1050 = vmatpush1.bf16.msra.mxu0 %v560
  %1051 = vmatprep.subr.bf16.mxu0 %v569
  %1052 = vmatpush1.bf16.msra.mxu0 %v568
  %1053 = vmatprep.subr.bf16.mxu0 %v577
  %1054 = vmatpush1.bf16.msra.mxu0 %v576
  %1055 = vmatprep.subr.bf16.mxu0 %v585
  %1056 = vmatpush1.bf16.msra.mxu0 %v584
  %1057 = vmatprep.subr.bf16.mxu0 %v593
  %1058 = vmatpush1.bf16.msra.mxu0 %v592
  %1059 = vmatprep.subr.bf16.mxu0 %v601
  %1060 = vmatpush1.bf16.msra.mxu0 %v600
  %1061 = vmatprep.subr.bf16.mxu0 %v609
  %1062 = vmatpush1.bf16.msra.mxu0 %v608
  %1063 = vmatprep.subr.bf16.mxu0 %v617
  %1064 = vmatpush1.bf16.msra.mxu0 %v616
  %1065 = vmatprep.subr.bf16.mxu0 %v625
  %1066 = vmatpush1.bf16.msra.mxu0 %v624
  %1067 = vmatprep.subr.bf16.mxu0 %v633
  %1068 = vmatpush1.bf16.msra.mxu0 %v632
  %1069 = vmatprep.subr.bf16.mxu0 %v641
  %1070 = vmatpush1.bf16.msra.mxu0 %v640
  %1071 = vmatprep.subr.bf16.mxu0 %v649
  %1072 = vmatpush1.bf16.msra.mxu0 %v648
  %1073 = vmatprep.subr.bf16.mxu0 %v657
  %1074 = vmatpush1.bf16.msra.mxu0 %v656
  %1075 = vmatprep.subr.bf16.mxu0 %v665
  %1076 = vmatpush1.bf16.msra.mxu0 %v664
  %1077 = vmatprep.subr.bf16.mxu0 %v673
  %1078 = vmatpush1.bf16.msra.mxu0 %v672
  %1079 = vmatprep.subr.bf16.mxu0 %v681
  %1080 = vmatpush1.bf16.msra.mxu0 %v680
  %1081 = vmatprep.mubr.bf16.mxu0 %v1037
  %1082 = vmatmul.mubr.bf16.gmra.mrb[0].mxu0 %v1036
  %v1083 = vpop.f32.mrb[0].mxu0
  %v1084 = vadd.f32 0.0, %v1083
  %v1085 = vpop.f32.mrb[0].mxu0
  %v1086 = vadd.f32 0.0, %v1085
  %v1087 = vpop.f32.mrb[0].mxu0
  %v1088 = vpop.f32.mrb[0].mxu0
  %1089 = vdwg.mxu0
  %1090 = vmatprep.subr.bf16.mxu0 %v563
  %1091 = vmatpush1.bf16.msra.mxu0 %v562
  %1092 = vmatprep.subr.bf16.mxu0 %v571
  %1093 = vmatpush1.bf16.msra.mxu0 %v570
  %1094 = vmatprep.subr.bf16.mxu0 %v579
  %1095 = vmatpush1.bf16.msra.mxu0 %v578
  %1096 = vmatprep.subr.bf16.mxu0 %v587
  %1097 = vmatpush1.bf16.msra.mxu0 %v586
  %1098 = vmatprep.subr.bf16.mxu0 %v595
  %1099 = vmatpush1.bf16.msra.mxu0 %v594
  %1100 = vmatprep.subr.bf16.mxu0 %v603
  %1101 = vmatpush1.bf16.msra.mxu0 %v602
  %1102 = vmatprep.subr.bf16.mxu0 %v611
  %1103 = vmatpush1.bf16.msra.mxu0 %v610
  %1104 = vmatprep.subr.bf16.mxu0 %v619
  %1105 = vmatpush1.bf16.msra.mxu0 %v618
  %1106 = vmatprep.subr.bf16.mxu0 %v627
  %1107 = vmatpush1.bf16.msra.mxu0 %v626
  %1108 = vmatprep.subr.bf16.mxu0 %v635
  %1109 = vmatpush1.bf16.msra.mxu0 %v634
  %1110 = vmatprep.subr.bf16.mxu0 %v643
  %1111 = vmatpush1.bf16.msra.mxu0 %v642
  %1112 = vmatprep.subr.bf16.mxu0 %v651
  %1113 = vmatpush1.bf16.msra.mxu0 %v650
  %1114 = vmatprep.subr.bf16.mxu0 %v659
  %1115 = vmatpush1.bf16.msra.mxu0 %v658
  %1116 = vmatprep.subr.bf16.mxu0 %v667
  %1117 = vmatpush1.bf16.msra.mxu0 %v666
  %1118 = vmatprep.subr.bf16.mxu0 %v675
  %1119 = vmatpush1.bf16.msra.mxu0 %v674
  %1120 = vmatprep.subr.bf16.mxu0 %v683
  %1121 = vmatpush1.bf16.msra.mxu0 %v682
  %1122 = vmatprep.mubr.bf16.mxu0 %v1037
  %1123 = vmatmul.mubr.bf16.gmra.mrb[0].mxu0 %v1036
  %v1124 = vpop.f32.mrb[0].mxu0
  %v1125 = vadd.f32 0.0, %v1124
  %v1126 = vpop.f32.mrb[0].mxu0
  %v1127 = vadd.f32 0.0, %v1126
  %v1128 = vpop.f32.mrb[0].mxu0
  %v1129 = vpop.f32.mrb[0].mxu0
  %1130 = vdwg.mxu0
  %1131 = vmatprep.subr.bf16.mxu0 %v565
  %1132 = vmatpush1.bf16.msra.mxu0 %v564
  %1133 = vmatprep.subr.bf16.mxu0 %v573
  %1134 = vmatpush1.bf16.msra.mxu0 %v572
  %1135 = vmatprep.subr.bf16.mxu0 %v581
  %1136 = vmatpush1.bf16.msra.mxu0 %v580
  %1137 = vmatprep.subr.bf16.mxu0 %v589
  %1138 = vmatpush1.bf16.msra.mxu0 %v588
  %1139 = vmatprep.subr.bf16.mxu0 %v597
  %1140 = vmatpush1.bf16.msra.mxu0 %v596
  %1141 = vmatprep.subr.bf16.mxu0 %v605
  %1142 = vmatpush1.bf16.msra.mxu0 %v604
  %1143 = vmatprep.subr.bf16.mxu0 %v613
  %1144 = vmatpush1.bf16.msra.mxu0 %v612
  %1145 = vmatprep.subr.bf16.mxu0 %v621
  %1146 = vmatpush1.bf16.msra.mxu0 %v620
  %1147 = vmatprep.subr.bf16.mxu0 %v629
  %1148 = vmatpush1.bf16.msra.mxu0 %v628
  %1149 = vmatprep.subr.bf16.mxu0 %v637
  %1150 = vmatpush1.bf16.msra.mxu0 %v636
  %1151 = vmatprep.subr.bf16.mxu0 %v645
  %1152 = vmatpush1.bf16.msra.mxu0 %v644
  %1153 = vmatprep.subr.bf16.mxu0 %v653
  %1154 = vmatpush1.bf16.msra.mxu0 %v652
  %1155 = vmatprep.subr.bf16.mxu0 %v661
  %1156 = vmatpush1.bf16.msra.mxu0 %v660
  %1157 = vmatprep.subr.bf16.mxu0 %v669
  %1158 = vmatpush1.bf16.msra.mxu0 %v668
  %1159 = vmatprep.subr.bf16.mxu0 %v677
  %1160 = vmatpush1.bf16.msra.mxu0 %v676
  %1161 = vmatprep.subr.bf16.mxu0 %v685
  %1162 = vmatpush1.bf16.msra.mxu0 %v684
  %1163 = vmatprep.mubr.bf16.mxu0 %v1037
  %1164 = vmatmul.mubr.bf16.gmra.mrb[0].mxu0 %v1036
  %v1165 = vpop.f32.mrb[0].mxu0
  %v1166 = vadd.f32 0.0, %v1165
  %v1167 = vpop.f32.mrb[0].mxu0
  %v1168 = vadd.f32 0.0, %v1167
  %v1169 = vpop.f32.mrb[0].mxu0
  %v1170 = vpop.f32.mrb[0].mxu0
  %1171 = vdwg.mxu0
  %1172 = vmatprep.subr.bf16.mxu0 %v567
  %1173 = vmatpush1.bf16.msra.mxu0 %v566
  %1174 = vmatprep.subr.bf16.mxu0 %v575
  %1175 = vmatpush1.bf16.msra.mxu0 %v574
  %1176 = vmatprep.subr.bf16.mxu0 %v583
  %1177 = vmatpush1.bf16.msra.mxu0 %v582
  %1178 = vmatprep.subr.bf16.mxu0 %v591
  %1179 = vmatpush1.bf16.msra.mxu0 %v590
  %1180 = vmatprep.subr.bf16.mxu0 %v599
  %1181 = vmatpush1.bf16.msra.mxu0 %v598
  %1182 = vmatprep.subr.bf16.mxu0 %v607
  %1183 = vmatpush1.bf16.msra.mxu0 %v606
  %1184 = vmatprep.subr.bf16.mxu0 %v615
  %1185 = vmatpush1.bf16.msra.mxu0 %v614
  %1186 = vmatprep.subr.bf16.mxu0 %v623
  %1187 = vmatpush1.bf16.msra.mxu0 %v622
  %1188 = vmatprep.subr.bf16.mxu0 %v631
  %1189 = vmatpush1.bf16.msra.mxu0 %v630
  %1190 = vmatprep.subr.bf16.mxu0 %v639
  %1191 = vmatpush1.bf16.msra.mxu0 %v638
  %1192 = vmatprep.subr.bf16.mxu0 %v647
  %1193 = vmatpush1.bf16.msra.mxu0 %v646
  %1194 = vmatprep.subr.bf16.mxu0 %v655
  %1195 = vmatpush1.bf16.msra.mxu0 %v654
  %1196 = vmatprep.subr.bf16.mxu0 %v663
  %1197 = vmatpush1.bf16.msra.mxu0 %v662
  %1198 = vmatprep.subr.bf16.mxu0 %v671
  %1199 = vmatpush1.bf16.msra.mxu0 %v670
  %1200 = vmatprep.subr.bf16.mxu0 %v679
  %1201 = vmatpush1.bf16.msra.mxu0 %v678
  %1202 = vmatprep.subr.bf16.mxu0 %v687
  %1203 = vmatpush1.bf16.msra.mxu0 %v686
  %1204 = vmatprep.mubr.bf16.mxu0 %v1037
  %1205 = vmatmul.mubr.bf16.gmra.mrb[0].mxu0 %v1036
  %v1206 = vpop.f32.mrb[0].mxu0
  %v1207 = vadd.f32 0.0, %v1206
  %v1208 = vpop.f32.mrb[0].mxu0
  %v1209 = vadd.f32 0.0, %v1208
  %v1210 = vpop.f32.mrb[0].mxu0
  %v1211 = vpop.f32.mrb[0].mxu0
  %1212 = vdwg.mxu0
  %v1213 = vadd.f32 %v1041, %v1084
  %v1214 = vadd.f32 %v1042, %v1086
  %v1215 = vadd.f32 %v1043, %v1125
  %v1216 = vadd.f32 %v1044, %v1127
  %v1217 = vadd.f32 %v1045, %v1166
  %v1218 = vadd.f32 %v1046, %v1168
  %v1219 = vadd.f32 %v1047, %v1207
  %v1220 = vadd.f32 %v1048, %v1209
  %v1221 = vxor.u32 %v1213, 2147483648
  %v1222 = vxor.u32 %v1214, 2147483648
  %v1223 = vxor.u32 %v1215, 2147483648
  %v1224 = vxor.u32 %v1216, 2147483648
  %v1225 = vxor.u32 %v1217, 2147483648
  %v1226 = vxor.u32 %v1218, 2147483648
  %v1227 = vmul.f32 %v1221, 1.442695
  %v1228 = vpow.pop %v1227
  %v1229 = vmul.f32 %v1222, 1.442695
  %v1230 = vpow.pop %v1229
  %v1231 = vmul.f32 %v1223, 1.442695
  %v1232 = vpow.pop %v1231
  %v1233 = vmul.f32 %v1224, 1.442695
  %v1234 = vpow.pop %v1233
  %v1235 = vmul.f32 %v1225, 1.442695
  %v1236 = vpow.pop %v1235
  %v1237 = vmul.f32 %v1226, 1.442695
  %v1238 = vpow.pop %v1237
  %v1239 = vadd.f32 %v1228, 1.0
  %v1240 = vadd.f32 %v1230, 1.0
  %v1241 = vadd.f32 %v1232, 1.0
  %v1242 = vadd.f32 %v1234, 1.0
  %v1243 = vadd.f32 %v1236, 1.0
  %v1244 = vadd.f32 %v1238, 1.0
  %v1245 = vrcp.pop %v1239
  %v1246 = vmul.f32 1.0, %v1245
  %v1247 = vrcp.pop %v1240
  %v1248 = vmul.f32 1.0, %v1247
  %v1249 = vrcp.pop %v1241
  %v1250 = vmul.f32 1.0, %v1249
  %v1251 = vrcp.pop %v1242
  %v1252 = vmul.f32 1.0, %v1251
  %v1253 = vrcp.pop %v1243
  %v1254 = vmul.f32 1.0, %v1253
  %v1255 = vrcp.pop %v1244
  %v1256 = vmul.f32 1.0, %v1255
  %v1257 = vtanh.pop %v1219
  %v1258 = vtanh.pop %v1220
  %v1259 = vmul.f32 %v1250, %v1030
  %v1260 = vmul.f32 %v1252, %v1031
  %v1261 = vmul.f32 %v1246, %v1257
  %v1262 = vmul.f32 %v1248, %v1258
  %v1263 = vadd.f32 %v1259, %v1261
  %v1264 = vadd.f32 %v1260, %v1262
  %v1265 = vtanh.pop %v1263
  %v1266 = vtanh.pop %v1264
  %v1267 = vmul.f32 %v1254, %v1265
  %v1268 = vmul.f32 %v1256, %v1266
  %v1269 = vpack.c.bf16 %v1267, %v1267
  %v1270 = vpack.c.bf16 %v1268, %v1268
  %s1271 = smul.u32 2, 8
  %s1272 = smul.addr %s1271, 8
  %s1273 = scalar_lea.vmem %s0, %s1272
  %v1274 = vld [vmem:[%s1273] sm:$0xff]
  %v1275 = vld [vmem:[%s1273 + $0x8] sm:$0xff]
  %v1276 = vld [vmem:[%s1273 + $0x10] sm:$0xff]
  %v1277 = vld [vmem:[%s1273 + $0x18] sm:$0xff]
  %v1278 = vld [vmem:[%s1273 + $0x20] sm:$0xff]
  %v1279 = vld [vmem:[%s1273 + $0x28] sm:$0xff]
  %v1280 = vld [vmem:[%s1273 + $0x30] sm:$0xff]
  %v1281 = vld [vmem:[%s1273 + $0x38] sm:$0xff]
  %1282 = vmatprep.subr.bf16.mxu0 %v561
  %1283 = vmatpush1.bf16.msra.mxu0 %v560
  %1284 = vmatprep.subr.bf16.mxu0 %v569
  %1285 = vmatpush1.bf16.msra.mxu0 %v568
  %1286 = vmatprep.subr.bf16.mxu0 %v577
  %1287 = vmatpush1.bf16.msra.mxu0 %v576
  %1288 = vmatprep.subr.bf16.mxu0 %v585
  %1289 = vmatpush1.bf16.msra.mxu0 %v584
  %1290 = vmatprep.subr.bf16.mxu0 %v593
  %1291 = vmatpush1.bf16.msra.mxu0 %v592
  %1292 = vmatprep.subr.bf16.mxu0 %v601
  %1293 = vmatpush1.bf16.msra.mxu0 %v600
  %1294 = vmatprep.subr.bf16.mxu0 %v609
  %1295 = vmatpush1.bf16.msra.mxu0 %v608
  %1296 = vmatprep.subr.bf16.mxu0 %v617
  %1297 = vmatpush1.bf16.msra.mxu0 %v616
  %1298 = vmatprep.subr.bf16.mxu0 %v625
  %1299 = vmatpush1.bf16.msra.mxu0 %v624
  %1300 = vmatprep.subr.bf16.mxu0 %v633
  %1301 = vmatpush1.bf16.msra.mxu0 %v632
  %1302 = vmatprep.subr.bf16.mxu0 %v641
  %1303 = vmatpush1.bf16.msra.mxu0 %v640
  %1304 = vmatprep.subr.bf16.mxu0 %v649
  %1305 = vmatpush1.bf16.msra.mxu0 %v648
  %1306 = vmatprep.subr.bf16.mxu0 %v657
  %1307 = vmatpush1.bf16.msra.mxu0 %v656
  %1308 = vmatprep.subr.bf16.mxu0 %v665
  %1309 = vmatpush1.bf16.msra.mxu0 %v664
  %1310 = vmatprep.subr.bf16.mxu0 %v673
  %1311 = vmatpush1.bf16.msra.mxu0 %v672
  %1312 = vmatprep.subr.bf16.mxu0 %v681
  %1313 = vmatpush1.bf16.msra.mxu0 %v680
  %1314 = vmatprep.mubr.bf16.mxu0 %v1270
  %1315 = vmatmul.mubr.bf16.gmra.mrb[0].mxu0 %v1269
  %v1316 = vpop.f32.mrb[0].mxu0
  %v1317 = vadd.f32 0.0, %v1316
  %v1318 = vpop.f32.mrb[0].mxu0
  %v1319 = vadd.f32 0.0, %v1318
  %v1320 = vpop.f32.mrb[0].mxu0
  %v1321 = vpop.f32.mrb[0].mxu0
  %1322 = vdwg.mxu0
  %1323 = vmatprep.subr.bf16.mxu0 %v563
  %1324 = vmatpush1.bf16.msra.mxu0 %v562
  %1325 = vmatprep.subr.bf16.mxu0 %v571
  %1326 = vmatpush1.bf16.msra.mxu0 %v570
  %1327 = vmatprep.subr.bf16.mxu0 %v579
  %1328 = vmatpush1.bf16.msra.mxu0 %v578
  %1329 = vmatprep.subr.bf16.mxu0 %v587
  %1330 = vmatpush1.bf16.msra.mxu0 %v586
  %1331 = vmatprep.subr.bf16.mxu0 %v595
  %1332 = vmatpush1.bf16.msra.mxu0 %v594
  %1333 = vmatprep.subr.bf16.mxu0 %v603
  %1334 = vmatpush1.bf16.msra.mxu0 %v602
  %1335 = vmatprep.subr.bf16.mxu0 %v611
  %1336 = vmatpush1.bf16.msra.mxu0 %v610
  %1337 = vmatprep.subr.bf16.mxu0 %v619
  %1338 = vmatpush1.bf16.msra.mxu0 %v618
  %1339 = vmatprep.subr.bf16.mxu0 %v627
  %1340 = vmatpush1.bf16.msra.mxu0 %v626
  %1341 = vmatprep.subr.bf16.mxu0 %v635
  %1342 = vmatpush1.bf16.msra.mxu0 %v634
  %1343 = vmatprep.subr.bf16.mxu0 %v643
  %1344 = vmatpush1.bf16.msra.mxu0 %v642
  %1345 = vmatprep.subr.bf16.mxu0 %v651
  %1346 = vmatpush1.bf16.msra.mxu0 %v650
  %1347 = vmatprep.subr.bf16.mxu0 %v659
  %1348 = vmatpush1.bf16.msra.mxu0 %v658
  %1349 = vmatprep.subr.bf16.mxu0 %v667
  %1350 = vmatpush1.bf16.msra.mxu0 %v666
  %1351 = vmatprep.subr.bf16.mxu0 %v675
  %1352 = vmatpush1.bf16.msra.mxu0 %v674
  %1353 = vmatprep.subr.bf16.mxu0 %v683
  %1354 = vmatpush1.bf16.msra.mxu0 %v682
  %1355 = vmatprep.mubr.bf16.mxu0 %v1270
  %1356 = vmatmul.mubr.bf16.gmra.mrb[0].mxu0 %v1269
  %v1357 = vpop.f32.mrb[0].mxu0
  %v1358 = vadd.f32 0.0, %v1357
  %v1359 = vpop.f32.mrb[0].mxu0
  %v1360 = vadd.f32 0.0, %v1359
  %v1361 = vpop.f32.mrb[0].mxu0
  %v1362 = vpop.f32.mrb[0].mxu0
  %1363 = vdwg.mxu0
  %1364 = vmatprep.subr.bf16.mxu0 %v565
  %1365 = vmatpush1.bf16.msra.mxu0 %v564
  %1366 = vmatprep.subr.bf16.mxu0 %v573
  %1367 = vmatpush1.bf16.msra.mxu0 %v572
  %1368 = vmatprep.subr.bf16.mxu0 %v581
  %1369 = vmatpush1.bf16.msra.mxu0 %v580
  %1370 = vmatprep.subr.bf16.mxu0 %v589
  %1371 = vmatpush1.bf16.msra.mxu0 %v588
  %1372 = vmatprep.subr.bf16.mxu0 %v597
  %1373 = vmatpush1.bf16.msra.mxu0 %v596
  %1374 = vmatprep.subr.bf16.mxu0 %v605
  %1375 = vmatpush1.bf16.msra.mxu0 %v604
  %1376 = vmatprep.subr.bf16.mxu0 %v613
  %1377 = vmatpush1.bf16.msra.mxu0 %v612
  %1378 = vmatprep.subr.bf16.mxu0 %v621
  %1379 = vmatpush1.bf16.msra.mxu0 %v620
  %1380 = vmatprep.subr.bf16.mxu0 %v629
  %1381 = vmatpush1.bf16.msra.mxu0 %v628
  %1382 = vmatprep.subr.bf16.mxu0 %v637
  %1383 = vmatpush1.bf16.msra.mxu0 %v636
  %1384 = vmatprep.subr.bf16.mxu0 %v645
  %1385 = vmatpush1.bf16.msra.mxu0 %v644
  %1386 = vmatprep.subr.bf16.mxu0 %v653
  %1387 = vmatpush1.bf16.msra.mxu0 %v652
  %1388 = vmatprep.subr.bf16.mxu0 %v661
  %1389 = vmatpush1.bf16.msra.mxu0 %v660
  %1390 = vmatprep.subr.bf16.mxu0 %v669
  %1391 = vmatpush1.bf16.msra.mxu0 %v668
  %1392 = vmatprep.subr.bf16.mxu0 %v677
  %1393 = vmatpush1.bf16.msra.mxu0 %v676
  %1394 = vmatprep.subr.bf16.mxu0 %v685
  %1395 = vmatpush1.bf16.msra.mxu0 %v684
  %1396 = vmatprep.mubr.bf16.mxu0 %v1270
  %1397 = vmatmul.mubr.bf16.gmra.mrb[0].mxu0 %v1269
  %v1398 = vpop.f32.mrb[0].mxu0
  %v1399 = vadd.f32 0.0, %v1398
  %v1400 = vpop.f32.mrb[0].mxu0
  %v1401 = vadd.f32 0.0, %v1400
  %v1402 = vpop.f32.mrb[0].mxu0
  %v1403 = vpop.f32.mrb[0].mxu0
  %1404 = vdwg.mxu0
  %1405 = vmatprep.subr.bf16.mxu0 %v567
  %1406 = vmatpush1.bf16.msra.mxu0 %v566
  %1407 = vmatprep.subr.bf16.mxu0 %v575
  %1408 = vmatpush1.bf16.msra.mxu0 %v574
  %1409 = vmatprep.subr.bf16.mxu0 %v583
  %1410 = vmatpush1.bf16.msra.mxu0 %v582
  %1411 = vmatprep.subr.bf16.mxu0 %v591
  %1412 = vmatpush1.bf16.msra.mxu0 %v590
  %1413 = vmatprep.subr.bf16.mxu0 %v599
  %1414 = vmatpush1.bf16.msra.mxu0 %v598
  %1415 = vmatprep.subr.bf16.mxu0 %v607
  %1416 = vmatpush1.bf16.msra.mxu0 %v606
  %1417 = vmatprep.subr.bf16.mxu0 %v615
  %1418 = vmatpush1.bf16.msra.mxu0 %v614
  %1419 = vmatprep.subr.bf16.mxu0 %v623
  %1420 = vmatpush1.bf16.msra.mxu0 %v622
  %1421 = vmatprep.subr.bf16.mxu0 %v631
  %1422 = vmatpush1.bf16.msra.mxu0 %v630
  %1423 = vmatprep.subr.bf16.mxu0 %v639
  %1424 = vmatpush1.bf16.msra.mxu0 %v638
  %1425 = vmatprep.subr.bf16.mxu0 %v647
  %1426 = vmatpush1.bf16.msra.mxu0 %v646
  %1427 = vmatprep.subr.bf16.mxu0 %v655
  %1428 = vmatpush1.bf16.msra.mxu0 %v654
  %1429 = vmatprep.subr.bf16.mxu0 %v663
  %1430 = vmatpush1.bf16.msra.mxu0 %v662
  %1431 = vmatprep.subr.bf16.mxu0 %v671
  %1432 = vmatpush1.bf16.msra.mxu0 %v670
  %1433 = vmatprep.subr.bf16.mxu0 %v679
  %1434 = vmatpush1.bf16.msra.mxu0 %v678
  %1435 = vmatprep.subr.bf16.mxu0 %v687
  %1436 = vmatpush1.bf16.msra.mxu0 %v686
  %1437 = vmatprep.mubr.bf16.mxu0 %v1270
  %1438 = vmatmul.mubr.bf16.gmra.mrb[0].mxu0 %v1269
  %v1439 = vpop.f32.mrb[0].mxu0
  %v1440 = vadd.f32 0.0, %v1439
  %v1441 = vpop.f32.mrb[0].mxu0
  %v1442 = vadd.f32 0.0, %v1441
  %v1443 = vpop.f32.mrb[0].mxu0
  %v1444 = vpop.f32.mrb[0].mxu0
  %1445 = vdwg.mxu0
  %v1446 = vadd.f32 %v1274, %v1317
  %v1447 = vadd.f32 %v1275, %v1319
  %v1448 = vadd.f32 %v1276, %v1358
  %v1449 = vadd.f32 %v1277, %v1360
  %v1450 = vadd.f32 %v1278, %v1399
  %v1451 = vadd.f32 %v1279, %v1401
  %v1452 = vadd.f32 %v1280, %v1440
  %v1453 = vadd.f32 %v1281, %v1442
  %v1454 = vxor.u32 %v1446, 2147483648
  %v1455 = vxor.u32 %v1447, 2147483648
  %v1456 = vxor.u32 %v1448, 2147483648
  %v1457 = vxor.u32 %v1449, 2147483648
  %v1458 = vxor.u32 %v1450, 2147483648
  %v1459 = vxor.u32 %v1451, 2147483648
  %v1460 = vmul.f32 %v1454, 1.442695
  %v1461 = vpow.pop %v1460
  %v1462 = vmul.f32 %v1455, 1.442695
  %v1463 = vpow.pop %v1462
  %v1464 = vmul.f32 %v1456, 1.442695
  %v1465 = vpow.pop %v1464
  %v1466 = vmul.f32 %v1457, 1.442695
  %v1467 = vpow.pop %v1466
  %v1468 = vmul.f32 %v1458, 1.442695
  %v1469 = vpow.pop %v1468
  %v1470 = vmul.f32 %v1459, 1.442695
  %v1471 = vpow.pop %v1470
  %v1472 = vadd.f32 %v1461, 1.0
  %v1473 = vadd.f32 %v1463, 1.0
  %v1474 = vadd.f32 %v1465, 1.0
  %v1475 = vadd.f32 %v1467, 1.0
  %v1476 = vadd.f32 %v1469, 1.0
  %v1477 = vadd.f32 %v1471, 1.0
  %v1478 = vrcp.pop %v1472
  %v1479 = vmul.f32 1.0, %v1478
  %v1480 = vrcp.pop %v1473
  %v1481 = vmul.f32 1.0, %v1480
  %v1482 = vrcp.pop %v1474
  %v1483 = vmul.f32 1.0, %v1482
  %v1484 = vrcp.pop %v1475
  %v1485 = vmul.f32 1.0, %v1484
  %v1486 = vrcp.pop %v1476
  %v1487 = vmul.f32 1.0, %v1486
  %v1488 = vrcp.pop %v1477
  %v1489 = vmul.f32 1.0, %v1488
  %v1490 = vtanh.pop %v1452
  %v1491 = vtanh.pop %v1453
  %v1492 = vmul.f32 %v1483, %v1263
  %v1493 = vmul.f32 %v1485, %v1264
  %v1494 = vmul.f32 %v1479, %v1490
  %v1495 = vmul.f32 %v1481, %v1491
  %v1496 = vadd.f32 %v1492, %v1494
  %v1497 = vadd.f32 %v1493, %v1495
  %v1498 = vtanh.pop %v1496
  %v1499 = vtanh.pop %v1497
  %v1500 = vmul.f32 %v1487, %v1498
  %v1501 = vmul.f32 %v1489, %v1499
  %v1502 = vpack.c.bf16 %v1500, %v1500
  %v1503 = vpack.c.bf16 %v1501, %v1501
  %s1504 = smul.u32 3, 8
  %s1505 = smul.addr %s1504, 8
  %s1506 = scalar_lea.vmem %s0, %s1505
  %v1507 = vld [vmem:[%s1506] sm:$0xff]
  %v1508 = vld [vmem:[%s1506 + $0x8] sm:$0xff]
  %v1509 = vld [vmem:[%s1506 + $0x10] sm:$0xff]
  %v1510 = vld [vmem:[%s1506 + $0x18] sm:$0xff]
  %v1511 = vld [vmem:[%s1506 + $0x20] sm:$0xff]
  %v1512 = vld [vmem:[%s1506 + $0x28] sm:$0xff]
  %v1513 = vld [vmem:[%s1506 + $0x30] sm:$0xff]
  %v1514 = vld [vmem:[%s1506 + $0x38] sm:$0xff]
  %1515 = vmatprep.subr.bf16.mxu0 %v561
  %1516 = vmatpush1.bf16.msra.mxu0 %v560
  %1517 = vmatprep.subr.bf16.mxu0 %v569
  %1518 = vmatpush1.bf16.msra.mxu0 %v568
  %1519 = vmatprep.subr.bf16.mxu0 %v577
  %1520 = vmatpush1.bf16.msra.mxu0 %v576
  %1521 = vmatprep.subr.bf16.mxu0 %v585
  %1522 = vmatpush1.bf16.msra.mxu0 %v584
  %1523 = vmatprep.subr.bf16.mxu0 %v593
  %1524 = vmatpush1.bf16.msra.mxu0 %v592
  %1525 = vmatprep.subr.bf16.mxu0 %v601
  %1526 = vmatpush1.bf16.msra.mxu0 %v600
  %1527 = vmatprep.subr.bf16.mxu0 %v609
  %1528 = vmatpush1.bf16.msra.mxu0 %v608
  %1529 = vmatprep.subr.bf16.mxu0 %v617
  %1530 = vmatpush1.bf16.msra.mxu0 %v616
  %1531 = vmatprep.subr.bf16.mxu0 %v625
  %1532 = vmatpush1.bf16.msra.mxu0 %v624
  %1533 = vmatprep.subr.bf16.mxu0 %v633
  %1534 = vmatpush1.bf16.msra.mxu0 %v632
  %1535 = vmatprep.subr.bf16.mxu0 %v641
  %1536 = vmatpush1.bf16.msra.mxu0 %v640
  %1537 = vmatprep.subr.bf16.mxu0 %v649
  %1538 = vmatpush1.bf16.msra.mxu0 %v648
  %1539 = vmatprep.subr.bf16.mxu0 %v657
  %1540 = vmatpush1.bf16.msra.mxu0 %v656
  %1541 = vmatprep.subr.bf16.mxu0 %v665
  %1542 = vmatpush1.bf16.msra.mxu0 %v664
  %1543 = vmatprep.subr.bf16.mxu0 %v673
  %1544 = vmatpush1.bf16.msra.mxu0 %v672
  %1545 = vmatprep.subr.bf16.mxu0 %v681
  %1546 = vmatpush1.bf16.msra.mxu0 %v680
  %1547 = vmatprep.mubr.bf16.mxu0 %v1503
  %1548 = vmatmul.mubr.bf16.gmra.mrb[0].mxu0 %v1502
  %v1549 = vpop.f32.mrb[0].mxu0
  %v1550 = vadd.f32 0.0, %v1549
  %v1551 = vpop.f32.mrb[0].mxu0
  %v1552 = vadd.f32 0.0, %v1551
  %v1553 = vpop.f32.mrb[0].mxu0
  %v1554 = vpop.f32.mrb[0].mxu0
  %1555 = vdwg.mxu0
  %1556 = vmatprep.subr.bf16.mxu0 %v563
  %1557 = vmatpush1.bf16.msra.mxu0 %v562
  %1558 = vmatprep.subr.bf16.mxu0 %v571
  %1559 = vmatpush1.bf16.msra.mxu0 %v570
  %1560 = vmatprep.subr.bf16.mxu0 %v579
  %1561 = vmatpush1.bf16.msra.mxu0 %v578
  %1562 = vmatprep.subr.bf16.mxu0 %v587
  %1563 = vmatpush1.bf16.msra.mxu0 %v586
  %1564 = vmatprep.subr.bf16.mxu0 %v595
  %1565 = vmatpush1.bf16.msra.mxu0 %v594
  %1566 = vmatprep.subr.bf16.mxu0 %v603
  %1567 = vmatpush1.bf16.msra.mxu0 %v602
  %1568 = vmatprep.subr.bf16.mxu0 %v611
  %1569 = vmatpush1.bf16.msra.mxu0 %v610
  %1570 = vmatprep.subr.bf16.mxu0 %v619
  %1571 = vmatpush1.bf16.msra.mxu0 %v618
  %1572 = vmatprep.subr.bf16.mxu0 %v627
  %1573 = vmatpush1.bf16.msra.mxu0 %v626
  %1574 = vmatprep.subr.bf16.mxu0 %v635
  %1575 = vmatpush1.bf16.msra.mxu0 %v634
  %1576 = vmatprep.subr.bf16.mxu0 %v643
  %1577 = vmatpush1.bf16.msra.mxu0 %v642
  %1578 = vmatprep.subr.bf16.mxu0 %v651
  %1579 = vmatpush1.bf16.msra.mxu0 %v650
  %1580 = vmatprep.subr.bf16.mxu0 %v659
  %1581 = vmatpush1.bf16.msra.mxu0 %v658
  %1582 = vmatprep.subr.bf16.mxu0 %v667
  %1583 = vmatpush1.bf16.msra.mxu0 %v666
  %1584 = vmatprep.subr.bf16.mxu0 %v675
  %1585 = vmatpush1.bf16.msra.mxu0 %v674
  %1586 = vmatprep.subr.bf16.mxu0 %v683
  %1587 = vmatpush1.bf16.msra.mxu0 %v682
  %1588 = vmatprep.mubr.bf16.mxu0 %v1503
  %1589 = vmatmul.mubr.bf16.gmra.mrb[0].mxu0 %v1502
  %v1590 = vpop.f32.mrb[0].mxu0
  %v1591 = vadd.f32 0.0, %v1590
  %v1592 = vpop.f32.mrb[0].mxu0
  %v1593 = vadd.f32 0.0, %v1592
  %v1594 = vpop.f32.mrb[0].mxu0
  %v1595 = vpop.f32.mrb[0].mxu0
  %1596 = vdwg.mxu0
  %1597 = vmatprep.subr.bf16.mxu0 %v565
  %1598 = vmatpush1.bf16.msra.mxu0 %v564
  %1599 = vmatprep.subr.bf16.mxu0 %v573
  %1600 = vmatpush1.bf16.msra.mxu0 %v572
  %1601 = vmatprep.subr.bf16.mxu0 %v581
  %1602 = vmatpush1.bf16.msra.mxu0 %v580
  %1603 = vmatprep.subr.bf16.mxu0 %v589
  %1604 = vmatpush1.bf16.msra.mxu0 %v588
  %1605 = vmatprep.subr.bf16.mxu0 %v597
  %1606 = vmatpush1.bf16.msra.mxu0 %v596
  %1607 = vmatprep.subr.bf16.mxu0 %v605
  %1608 = vmatpush1.bf16.msra.mxu0 %v604
  %1609 = vmatprep.subr.bf16.mxu0 %v613
  %1610 = vmatpush1.bf16.msra.mxu0 %v612
  %1611 = vmatprep.subr.bf16.mxu0 %v621
  %1612 = vmatpush1.bf16.msra.mxu0 %v620
  %1613 = vmatprep.subr.bf16.mxu0 %v629
  %1614 = vmatpush1.bf16.msra.mxu0 %v628
  %1615 = vmatprep.subr.bf16.mxu0 %v637
  %1616 = vmatpush1.bf16.msra.mxu0 %v636
  %1617 = vmatprep.subr.bf16.mxu0 %v645
  %1618 = vmatpush1.bf16.msra.mxu0 %v644
  %1619 = vmatprep.subr.bf16.mxu0 %v653
  %1620 = vmatpush1.bf16.msra.mxu0 %v652
  %1621 = vmatprep.subr.bf16.mxu0 %v661
  %1622 = vmatpush1.bf16.msra.mxu0 %v660
  %1623 = vmatprep.subr.bf16.mxu0 %v669
  %1624 = vmatpush1.bf16.msra.mxu0 %v668
  %1625 = vmatprep.subr.bf16.mxu0 %v677
  %1626 = vmatpush1.bf16.msra.mxu0 %v676
  %1627 = vmatprep.subr.bf16.mxu0 %v685
  %1628 = vmatpush1.bf16.msra.mxu0 %v684
  %1629 = vmatprep.mubr.bf16.mxu0 %v1503
  %1630 = vmatmul.mubr.bf16.gmra.mrb[0].mxu0 %v1502
  %v1631 = vpop.f32.mrb[0].mxu0
  %v1632 = vadd.f32 0.0, %v1631
  %v1633 = vpop.f32.mrb[0].mxu0
  %v1634 = vadd.f32 0.0, %v1633
  %v1635 = vpop.f32.mrb[0].mxu0
  %v1636 = vpop.f32.mrb[0].mxu0
  %1637 = vdwg.mxu0
  %1638 = vmatprep.subr.bf16.mxu0 %v567
  %1639 = vmatpush1.bf16.msra.mxu0 %v566
  %1640 = vmatprep.subr.bf16.mxu0 %v575
  %1641 = vmatpush1.bf16.msra.mxu0 %v574
  %1642 = vmatprep.subr.bf16.mxu0 %v583
  %1643 = vmatpush1.bf16.msra.mxu0 %v582
  %1644 = vmatprep.subr.bf16.mxu0 %v591
  %1645 = vmatpush1.bf16.msra.mxu0 %v590
  %1646 = vmatprep.subr.bf16.mxu0 %v599
  %1647 = vmatpush1.bf16.msra.mxu0 %v598
  %1648 = vmatprep.subr.bf16.mxu0 %v607
  %1649 = vmatpush1.bf16.msra.mxu0 %v606
  %1650 = vmatprep.subr.bf16.mxu0 %v615
  %1651 = vmatpush1.bf16.msra.mxu0 %v614
  %1652 = vmatprep.subr.bf16.mxu0 %v623
  %1653 = vmatpush1.bf16.msra.mxu0 %v622
  %1654 = vmatprep.subr.bf16.mxu0 %v631
  %1655 = vmatpush1.bf16.msra.mxu0 %v630
  %1656 = vmatprep.subr.bf16.mxu0 %v639
  %1657 = vmatpush1.bf16.msra.mxu0 %v638
  %1658 = vmatprep.subr.bf16.mxu0 %v647
  %1659 = vmatpush1.bf16.msra.mxu0 %v646
  %1660 = vmatprep.subr.bf16.mxu0 %v655
  %1661 = vmatpush1.bf16.msra.mxu0 %v654
  %1662 = vmatprep.subr.bf16.mxu0 %v663
  %1663 = vmatpush1.bf16.msra.mxu0 %v662
  %1664 = vmatprep.subr.bf16.mxu0 %v671
  %1665 = vmatpush1.bf16.msra.mxu0 %v670
  %1666 = vmatprep.subr.bf16.mxu0 %v679
  %1667 = vmatpush1.bf16.msra.mxu0 %v678
  %1668 = vmatprep.subr.bf16.mxu0 %v687
  %1669 = vmatpush1.bf16.msra.mxu0 %v686
  %1670 = vmatprep.mubr.bf16.mxu0 %v1503
  %1671 = vmatmul.mubr.bf16.gmra.mrb[0].mxu0 %v1502
  %v1672 = vpop.f32.mrb[0].mxu0
  %v1673 = vadd.f32 0.0, %v1672
  %v1674 = vpop.f32.mrb[0].mxu0
  %v1675 = vadd.f32 0.0, %v1674
  %v1676 = vpop.f32.mrb[0].mxu0
  %v1677 = vpop.f32.mrb[0].mxu0
  %1678 = vdwg.mxu0
  %v1679 = vadd.f32 %v1507, %v1550
  %v1680 = vadd.f32 %v1508, %v1552
  %v1681 = vadd.f32 %v1509, %v1591
  %v1682 = vadd.f32 %v1510, %v1593
  %v1683 = vadd.f32 %v1511, %v1632
  %v1684 = vadd.f32 %v1512, %v1634
  %v1685 = vadd.f32 %v1513, %v1673
  %v1686 = vadd.f32 %v1514, %v1675
  %v1687 = vxor.u32 %v1679, 2147483648
  %v1688 = vxor.u32 %v1680, 2147483648
  %v1689 = vxor.u32 %v1681, 2147483648
  %v1690 = vxor.u32 %v1682, 2147483648
  %v1691 = vxor.u32 %v1683, 2147483648
  %v1692 = vxor.u32 %v1684, 2147483648
  %v1693 = vmul.f32 %v1687, 1.442695
  %v1694 = vpow.pop %v1693
  %v1695 = vmul.f32 %v1688, 1.442695
  %v1696 = vpow.pop %v1695
  %v1697 = vmul.f32 %v1689, 1.442695
  %v1698 = vpow.pop %v1697
  %v1699 = vmul.f32 %v1690, 1.442695
  %v1700 = vpow.pop %v1699
  %v1701 = vmul.f32 %v1691, 1.442695
  %v1702 = vpow.pop %v1701
  %v1703 = vmul.f32 %v1692, 1.442695
  %v1704 = vpow.pop %v1703
  %v1705 = vadd.f32 %v1694, 1.0
  %v1706 = vadd.f32 %v1696, 1.0
  %v1707 = vadd.f32 %v1698, 1.0
  %v1708 = vadd.f32 %v1700, 1.0
  %v1709 = vadd.f32 %v1702, 1.0
  %v1710 = vadd.f32 %v1704, 1.0
  %v1711 = vrcp.pop %v1705
  %v1712 = vmul.f32 1.0, %v1711
  %v1713 = vrcp.pop %v1706
  %v1714 = vmul.f32 1.0, %v1713
  %v1715 = vrcp.pop %v1707
  %v1716 = vmul.f32 1.0, %v1715
  %v1717 = vrcp.pop %v1708
  %v1718 = vmul.f32 1.0, %v1717
  %v1719 = vrcp.pop %v1709
  %v1720 = vmul.f32 1.0, %v1719
  %v1721 = vrcp.pop %v1710
  %v1722 = vmul.f32 1.0, %v1721
  %v1723 = vtanh.pop %v1685
  %v1724 = vtanh.pop %v1686
  %v1725 = vmul.f32 %v1716, %v1496
  %v1726 = vmul.f32 %v1718, %v1497
  %v1727 = vmul.f32 %v1712, %v1723
  %v1728 = vmul.f32 %v1714, %v1724
  %v1729 = vadd.f32 %v1725, %v1727
  %v1730 = vadd.f32 %v1726, %v1728
  %v1731 = vtanh.pop %v1729
  %v1732 = vtanh.pop %v1730
  %v1733 = vmul.f32 %v1720, %v1731
  %v1734 = vmul.f32 %v1722, %v1732
  %v1735 = vpack.c.bf16 %v1733, %v1733
  %v1736 = vpack.c.bf16 %v1734, %v1734
  %s1737 = smul.u32 4, 8
  %s1738 = smul.addr %s1737, 8
  %s1739 = scalar_lea.vmem %s0, %s1738
  %v1740 = vld [vmem:[%s1739] sm:$0xff]
  %v1741 = vld [vmem:[%s1739 + $0x8] sm:$0xff]
  %v1742 = vld [vmem:[%s1739 + $0x10] sm:$0xff]
  %v1743 = vld [vmem:[%s1739 + $0x18] sm:$0xff]
  %v1744 = vld [vmem:[%s1739 + $0x20] sm:$0xff]
  %v1745 = vld [vmem:[%s1739 + $0x28] sm:$0xff]
  %v1746 = vld [vmem:[%s1739 + $0x30] sm:$0xff]
  %v1747 = vld [vmem:[%s1739 + $0x38] sm:$0xff]
  %1748 = vmatprep.subr.bf16.mxu0 %v561
  %1749 = vmatpush1.bf16.msra.mxu0 %v560
  %1750 = vmatprep.subr.bf16.mxu0 %v569
  %1751 = vmatpush1.bf16.msra.mxu0 %v568
  %1752 = vmatprep.subr.bf16.mxu0 %v577
  %1753 = vmatpush1.bf16.msra.mxu0 %v576
  %1754 = vmatprep.subr.bf16.mxu0 %v585
  %1755 = vmatpush1.bf16.msra.mxu0 %v584
  %1756 = vmatprep.subr.bf16.mxu0 %v593
  %1757 = vmatpush1.bf16.msra.mxu0 %v592
  %1758 = vmatprep.subr.bf16.mxu0 %v601
  %1759 = vmatpush1.bf16.msra.mxu0 %v600
  %1760 = vmatprep.subr.bf16.mxu0 %v609
  %1761 = vmatpush1.bf16.msra.mxu0 %v608
  %1762 = vmatprep.subr.bf16.mxu0 %v617
  %1763 = vmatpush1.bf16.msra.mxu0 %v616
  %1764 = vmatprep.subr.bf16.mxu0 %v625
  %1765 = vmatpush1.bf16.msra.mxu0 %v624
  %1766 = vmatprep.subr.bf16.mxu0 %v633
  %1767 = vmatpush1.bf16.msra.mxu0 %v632
  %1768 = vmatprep.subr.bf16.mxu0 %v641
  %1769 = vmatpush1.bf16.msra.mxu0 %v640
  %1770 = vmatprep.subr.bf16.mxu0 %v649
  %1771 = vmatpush1.bf16.msra.mxu0 %v648
  %1772 = vmatprep.subr.bf16.mxu0 %v657
  %1773 = vmatpush1.bf16.msra.mxu0 %v656
  %1774 = vmatprep.subr.bf16.mxu0 %v665
  %1775 = vmatpush1.bf16.msra.mxu0 %v664
  %1776 = vmatprep.subr.bf16.mxu0 %v673
  %1777 = vmatpush1.bf16.msra.mxu0 %v672
  %1778 = vmatprep.subr.bf16.mxu0 %v681
  %1779 = vmatpush1.bf16.msra.mxu0 %v680
  %1780 = vmatprep.mubr.bf16.mxu0 %v1736
  %1781 = vmatmul.mubr.bf16.gmra.mrb[0].mxu0 %v1735
  %v1782 = vpop.f32.mrb[0].mxu0
  %v1783 = vadd.f32 0.0, %v1782
  %v1784 = vpop.f32.mrb[0].mxu0
  %v1785 = vadd.f32 0.0, %v1784
  %v1786 = vpop.f32.mrb[0].mxu0
  %v1787 = vpop.f32.mrb[0].mxu0
  %1788 = vdwg.mxu0
  %1789 = vmatprep.subr.bf16.mxu0 %v563
  %1790 = vmatpush1.bf16.msra.mxu0 %v562
  %1791 = vmatprep.subr.bf16.mxu0 %v571
  %1792 = vmatpush1.bf16.msra.mxu0 %v570
  %1793 = vmatprep.subr.bf16.mxu0 %v579
  %1794 = vmatpush1.bf16.msra.mxu0 %v578
  %1795 = vmatprep.subr.bf16.mxu0 %v587
  %1796 = vmatpush1.bf16.msra.mxu0 %v586
  %1797 = vmatprep.subr.bf16.mxu0 %v595
  %1798 = vmatpush1.bf16.msra.mxu0 %v594
  %1799 = vmatprep.subr.bf16.mxu0 %v603
  %1800 = vmatpush1.bf16.msra.mxu0 %v602
  %1801 = vmatprep.subr.bf16.mxu0 %v611
  %1802 = vmatpush1.bf16.msra.mxu0 %v610
  %1803 = vmatprep.subr.bf16.mxu0 %v619
  %1804 = vmatpush1.bf16.msra.mxu0 %v618
  %1805 = vmatprep.subr.bf16.mxu0 %v627
  %1806 = vmatpush1.bf16.msra.mxu0 %v626
  %1807 = vmatprep.subr.bf16.mxu0 %v635
  %1808 = vmatpush1.bf16.msra.mxu0 %v634
  %1809 = vmatprep.subr.bf16.mxu0 %v643
  %1810 = vmatpush1.bf16.msra.mxu0 %v642
  %1811 = vmatprep.subr.bf16.mxu0 %v651
  %1812 = vmatpush1.bf16.msra.mxu0 %v650
  %1813 = vmatprep.subr.bf16.mxu0 %v659
  %1814 = vmatpush1.bf16.msra.mxu0 %v658
  %1815 = vmatprep.subr.bf16.mxu0 %v667
  %1816 = vmatpush1.bf16.msra.mxu0 %v666
  %1817 = vmatprep.subr.bf16.mxu0 %v675
  %1818 = vmatpush1.bf16.msra.mxu0 %v674
  %1819 = vmatprep.subr.bf16.mxu0 %v683
  %1820 = vmatpush1.bf16.msra.mxu0 %v682
  %1821 = vmatprep.mubr.bf16.mxu0 %v1736
  %1822 = vmatmul.mubr.bf16.gmra.mrb[0].mxu0 %v1735
  %v1823 = vpop.f32.mrb[0].mxu0
  %v1824 = vadd.f32 0.0, %v1823
  %v1825 = vpop.f32.mrb[0].mxu0
  %v1826 = vadd.f32 0.0, %v1825
  %v1827 = vpop.f32.mrb[0].mxu0
  %v1828 = vpop.f32.mrb[0].mxu0
  %1829 = vdwg.mxu0
  %1830 = vmatprep.subr.bf16.mxu0 %v565
  %1831 = vmatpush1.bf16.msra.mxu0 %v564
  %1832 = vmatprep.subr.bf16.mxu0 %v573
  %1833 = vmatpush1.bf16.msra.mxu0 %v572
  %1834 = vmatprep.subr.bf16.mxu0 %v581
  %1835 = vmatpush1.bf16.msra.mxu0 %v580
  %1836 = vmatprep.subr.bf16.mxu0 %v589
  %1837 = vmatpush1.bf16.msra.mxu0 %v588
  %1838 = vmatprep.subr.bf16.mxu0 %v597
  %1839 = vmatpush1.bf16.msra.mxu0 %v596
  %1840 = vmatprep.subr.bf16.mxu0 %v605
  %1841 = vmatpush1.bf16.msra.mxu0 %v604
  %1842 = vmatprep.subr.bf16.mxu0 %v613
  %1843 = vmatpush1.bf16.msra.mxu0 %v612
  %1844 = vmatprep.subr.bf16.mxu0 %v621
  %1845 = vmatpush1.bf16.msra.mxu0 %v620
  %1846 = vmatprep.subr.bf16.mxu0 %v629
  %1847 = vmatpush1.bf16.msra.mxu0 %v628
  %1848 = vmatprep.subr.bf16.mxu0 %v637
  %1849 = vmatpush1.bf16.msra.mxu0 %v636
  %1850 = vmatprep.subr.bf16.mxu0 %v645
  %1851 = vmatpush1.bf16.msra.mxu0 %v644
  %1852 = vmatprep.subr.bf16.mxu0 %v653
  %1853 = vmatpush1.bf16.msra.mxu0 %v652
  %1854 = vmatprep.subr.bf16.mxu0 %v661
  %1855 = vmatpush1.bf16.msra.mxu0 %v660
  %1856 = vmatprep.subr.bf16.mxu0 %v669
  %1857 = vmatpush1.bf16.msra.mxu0 %v668
  %1858 = vmatprep.subr.bf16.mxu0 %v677
  %1859 = vmatpush1.bf16.msra.mxu0 %v676
  %1860 = vmatprep.subr.bf16.mxu0 %v685
  %1861 = vmatpush1.bf16.msra.mxu0 %v684
  %1862 = vmatprep.mubr.bf16.mxu0 %v1736
  %1863 = vmatmul.mubr.bf16.gmra.mrb[0].mxu0 %v1735
  %v1864 = vpop.f32.mrb[0].mxu0
  %v1865 = vadd.f32 0.0, %v1864
  %v1866 = vpop.f32.mrb[0].mxu0
  %v1867 = vadd.f32 0.0, %v1866
  %v1868 = vpop.f32.mrb[0].mxu0
  %v1869 = vpop.f32.mrb[0].mxu0
  %1870 = vdwg.mxu0
  %1871 = vmatprep.subr.bf16.mxu0 %v567
  %1872 = vmatpush1.bf16.msra.mxu0 %v566
  %1873 = vmatprep.subr.bf16.mxu0 %v575
  %1874 = vmatpush1.bf16.msra.mxu0 %v574
  %1875 = vmatprep.subr.bf16.mxu0 %v583
  %1876 = vmatpush1.bf16.msra.mxu0 %v582
  %1877 = vmatprep.subr.bf16.mxu0 %v591
  %1878 = vmatpush1.bf16.msra.mxu0 %v590
  %1879 = vmatprep.subr.bf16.mxu0 %v599
  %1880 = vmatpush1.bf16.msra.mxu0 %v598
  %1881 = vmatprep.subr.bf16.mxu0 %v607
  %1882 = vmatpush1.bf16.msra.mxu0 %v606
  %1883 = vmatprep.subr.bf16.mxu0 %v615
  %1884 = vmatpush1.bf16.msra.mxu0 %v614
  %1885 = vmatprep.subr.bf16.mxu0 %v623
  %1886 = vmatpush1.bf16.msra.mxu0 %v622
  %1887 = vmatprep.subr.bf16.mxu0 %v631
  %1888 = vmatpush1.bf16.msra.mxu0 %v630
  %1889 = vmatprep.subr.bf16.mxu0 %v639
  %1890 = vmatpush1.bf16.msra.mxu0 %v638
  %1891 = vmatprep.subr.bf16.mxu0 %v647
  %1892 = vmatpush1.bf16.msra.mxu0 %v646
  %1893 = vmatprep.subr.bf16.mxu0 %v655
  %1894 = vmatpush1.bf16.msra.mxu0 %v654
  %1895 = vmatprep.subr.bf16.mxu0 %v663
  %1896 = vmatpush1.bf16.msra.mxu0 %v662
  %1897 = vmatprep.subr.bf16.mxu0 %v671
  %1898 = vmatpush1.bf16.msra.mxu0 %v670
  %1899 = vmatprep.subr.bf16.mxu0 %v679
  %1900 = vmatpush1.bf16.msra.mxu0 %v678
  %1901 = vmatprep.subr.bf16.mxu0 %v687
  %1902 = vmatpush1.bf16.msra.mxu0 %v686
  %1903 = vmatprep.mubr.bf16.mxu0 %v1736
  %1904 = vmatmul.mubr.bf16.gmra.mrb[0].mxu0 %v1735
  %v1905 = vpop.f32.mrb[0].mxu0
  %v1906 = vadd.f32 0.0, %v1905
  %v1907 = vpop.f32.mrb[0].mxu0
  %v1908 = vadd.f32 0.0, %v1907
  %v1909 = vpop.f32.mrb[0].mxu0
  %v1910 = vpop.f32.mrb[0].mxu0
  %1911 = vdwg.mxu0
  %v1912 = vadd.f32 %v1740, %v1783
  %v1913 = vadd.f32 %v1741, %v1785
  %v1914 = vadd.f32 %v1742, %v1824
  %v1915 = vadd.f32 %v1743, %v1826
  %v1916 = vadd.f32 %v1744, %v1865
  %v1917 = vadd.f32 %v1745, %v1867
  %v1918 = vadd.f32 %v1746, %v1906
  %v1919 = vadd.f32 %v1747, %v1908
  %v1920 = vxor.u32 %v1912, 2147483648
  %v1921 = vxor.u32 %v1913, 2147483648
  %v1922 = vxor.u32 %v1914, 2147483648
  %v1923 = vxor.u32 %v1915, 2147483648
  %v1924 = vxor.u32 %v1916, 2147483648
  %v1925 = vxor.u32 %v1917, 2147483648
  %v1926 = vmul.f32 %v1920, 1.442695
  %v1927 = vpow.pop %v1926
  %v1928 = vmul.f32 %v1921, 1.442695
  %v1929 = vpow.pop %v1928
  %v1930 = vmul.f32 %v1922, 1.442695
  %v1931 = vpow.pop %v1930
  %v1932 = vmul.f32 %v1923, 1.442695
  %v1933 = vpow.pop %v1932
  %v1934 = vmul.f32 %v1924, 1.442695
  %v1935 = vpow.pop %v1934
  %v1936 = vmul.f32 %v1925, 1.442695
  %v1937 = vpow.pop %v1936
  %v1938 = vadd.f32 %v1927, 1.0
  %v1939 = vadd.f32 %v1929, 1.0
  %v1940 = vadd.f32 %v1931, 1.0
  %v1941 = vadd.f32 %v1933, 1.0
  %v1942 = vadd.f32 %v1935, 1.0
  %v1943 = vadd.f32 %v1937, 1.0
  %v1944 = vrcp.pop %v1938
  %v1945 = vmul.f32 1.0, %v1944
  %v1946 = vrcp.pop %v1939
  %v1947 = vmul.f32 1.0, %v1946
  %v1948 = vrcp.pop %v1940
  %v1949 = vmul.f32 1.0, %v1948
  %v1950 = vrcp.pop %v1941
  %v1951 = vmul.f32 1.0, %v1950
  %v1952 = vrcp.pop %v1942
  %v1953 = vmul.f32 1.0, %v1952
  %v1954 = vrcp.pop %v1943
  %v1955 = vmul.f32 1.0, %v1954
  %v1956 = vtanh.pop %v1918
  %v1957 = vtanh.pop %v1919
  %v1958 = vmul.f32 %v1949, %v1729
  %v1959 = vmul.f32 %v1951, %v1730
  %v1960 = vmul.f32 %v1945, %v1956
  %v1961 = vmul.f32 %v1947, %v1957
  %v1962 = vadd.f32 %v1958, %v1960
  %v1963 = vadd.f32 %v1959, %v1961
  %v1964 = vtanh.pop %v1962
  %v1965 = vtanh.pop %v1963
  %v1966 = vmul.f32 %v1953, %v1964
  %v1967 = vmul.f32 %v1955, %v1965
  %v1968 = vpack.c.bf16 %v1966, %v1966
  %v1969 = vpack.c.bf16 %v1967, %v1967
  %s1970 = smul.u32 5, 8
  %s1971 = smul.addr %s1970, 8
  %s1972 = scalar_lea.vmem %s0, %s1971
  %v1973 = vld [vmem:[%s1972] sm:$0xff]
  %v1974 = vld [vmem:[%s1972 + $0x8] sm:$0xff]
  %v1975 = vld [vmem:[%s1972 + $0x10] sm:$0xff]
  %v1976 = vld [vmem:[%s1972 + $0x18] sm:$0xff]
  %v1977 = vld [vmem:[%s1972 + $0x20] sm:$0xff]
  %v1978 = vld [vmem:[%s1972 + $0x28] sm:$0xff]
  %v1979 = vld [vmem:[%s1972 + $0x30] sm:$0xff]
  %v1980 = vld [vmem:[%s1972 + $0x38] sm:$0xff]
  %1981 = vmatprep.subr.bf16.mxu0 %v561
  %1982 = vmatpush1.bf16.msra.mxu0 %v560
  %1983 = vmatprep.subr.bf16.mxu0 %v569
  %1984 = vmatpush1.bf16.msra.mxu0 %v568
  %1985 = vmatprep.subr.bf16.mxu0 %v577
  %1986 = vmatpush1.bf16.msra.mxu0 %v576
  %1987 = vmatprep.subr.bf16.mxu0 %v585
  %1988 = vmatpush1.bf16.msra.mxu0 %v584
  %1989 = vmatprep.subr.bf16.mxu0 %v593
  %1990 = vmatpush1.bf16.msra.mxu0 %v592
  %1991 = vmatprep.subr.bf16.mxu0 %v601
  %1992 = vmatpush1.bf16.msra.mxu0 %v600
  %1993 = vmatprep.subr.bf16.mxu0 %v609
  %1994 = vmatpush1.bf16.msra.mxu0 %v608
  %1995 = vmatprep.subr.bf16.mxu0 %v617
  %1996 = vmatpush1.bf16.msra.mxu0 %v616
  %1997 = vmatprep.subr.bf16.mxu0 %v625
  %1998 = vmatpush1.bf16.msra.mxu0 %v624
  %1999 = vmatprep.subr.bf16.mxu0 %v633
  %2000 = vmatpush1.bf16.msra.mxu0 %v632
  %2001 = vmatprep.subr.bf16.mxu0 %v641
  %2002 = vmatpush1.bf16.msra.mxu0 %v640
  %2003 = vmatprep.subr.bf16.mxu0 %v649
  %2004 = vmatpush1.bf16.msra.mxu0 %v648
  %2005 = vmatprep.subr.bf16.mxu0 %v657
  %2006 = vmatpush1.bf16.msra.mxu0 %v656
  %2007 = vmatprep.subr.bf16.mxu0 %v665
  %2008 = vmatpush1.bf16.msra.mxu0 %v664
  %2009 = vmatprep.subr.bf16.mxu0 %v673
  %2010 = vmatpush1.bf16.msra.mxu0 %v672
  %2011 = vmatprep.subr.bf16.mxu0 %v681
  %2012 = vmatpush1.bf16.msra.mxu0 %v680
  %2013 = vmatprep.mubr.bf16.mxu0 %v1969
  %2014 = vmatmul.mubr.bf16.gmra.mrb[0].mxu0 %v1968
  %v2015 = vpop.f32.mrb[0].mxu0
  %v2016 = vadd.f32 0.0, %v2015
  %v2017 = vpop.f32.mrb[0].mxu0
  %v2018 = vadd.f32 0.0, %v2017
  %v2019 = vpop.f32.mrb[0].mxu0
  %v2020 = vpop.f32.mrb[0].mxu0
  %2021 = vdwg.mxu0
  %2022 = vmatprep.subr.bf16.mxu0 %v563
  %2023 = vmatpush1.bf16.msra.mxu0 %v562
  %2024 = vmatprep.subr.bf16.mxu0 %v571
  %2025 = vmatpush1.bf16.msra.mxu0 %v570
  %2026 = vmatprep.subr.bf16.mxu0 %v579
  %2027 = vmatpush1.bf16.msra.mxu0 %v578
  %2028 = vmatprep.subr.bf16.mxu0 %v587
  %2029 = vmatpush1.bf16.msra.mxu0 %v586
  %2030 = vmatprep.subr.bf16.mxu0 %v595
  %2031 = vmatpush1.bf16.msra.mxu0 %v594
  %2032 = vmatprep.subr.bf16.mxu0 %v603
  %2033 = vmatpush1.bf16.msra.mxu0 %v602
  %2034 = vmatprep.subr.bf16.mxu0 %v611
  %2035 = vmatpush1.bf16.msra.mxu0 %v610
  %2036 = vmatprep.subr.bf16.mxu0 %v619
  %2037 = vmatpush1.bf16.msra.mxu0 %v618
  %2038 = vmatprep.subr.bf16.mxu0 %v627
  %2039 = vmatpush1.bf16.msra.mxu0 %v626
  %2040 = vmatprep.subr.bf16.mxu0 %v635
  %2041 = vmatpush1.bf16.msra.mxu0 %v634
  %2042 = vmatprep.subr.bf16.mxu0 %v643
  %2043 = vmatpush1.bf16.msra.mxu0 %v642
  %2044 = vmatprep.subr.bf16.mxu0 %v651
  %2045 = vmatpush1.bf16.msra.mxu0 %v650
  %2046 = vmatprep.subr.bf16.mxu0 %v659
  %2047 = vmatpush1.bf16.msra.mxu0 %v658
  %2048 = vmatprep.subr.bf16.mxu0 %v667
  %2049 = vmatpush1.bf16.msra.mxu0 %v666
  %2050 = vmatprep.subr.bf16.mxu0 %v675
  %2051 = vmatpush1.bf16.msra.mxu0 %v674
  %2052 = vmatprep.subr.bf16.mxu0 %v683
  %2053 = vmatpush1.bf16.msra.mxu0 %v682
  %2054 = vmatprep.mubr.bf16.mxu0 %v1969
  %2055 = vmatmul.mubr.bf16.gmra.mrb[0].mxu0 %v1968
  %v2056 = vpop.f32.mrb[0].mxu0
  %v2057 = vadd.f32 0.0, %v2056
  %v2058 = vpop.f32.mrb[0].mxu0
  %v2059 = vadd.f32 0.0, %v2058
  %v2060 = vpop.f32.mrb[0].mxu0
  %v2061 = vpop.f32.mrb[0].mxu0
  %2062 = vdwg.mxu0
  %2063 = vmatprep.subr.bf16.mxu0 %v565
  %2064 = vmatpush1.bf16.msra.mxu0 %v564
  %2065 = vmatprep.subr.bf16.mxu0 %v573
  %2066 = vmatpush1.bf16.msra.mxu0 %v572
  %2067 = vmatprep.subr.bf16.mxu0 %v581
  %2068 = vmatpush1.bf16.msra.mxu0 %v580
  %2069 = vmatprep.subr.bf16.mxu0 %v589
  %2070 = vmatpush1.bf16.msra.mxu0 %v588
  %2071 = vmatprep.subr.bf16.mxu0 %v597
  %2072 = vmatpush1.bf16.msra.mxu0 %v596
  %2073 = vmatprep.subr.bf16.mxu0 %v605
  %2074 = vmatpush1.bf16.msra.mxu0 %v604
  %2075 = vmatprep.subr.bf16.mxu0 %v613
  %2076 = vmatpush1.bf16.msra.mxu0 %v612
  %2077 = vmatprep.subr.bf16.mxu0 %v621
  %2078 = vmatpush1.bf16.msra.mxu0 %v620
  %2079 = vmatprep.subr.bf16.mxu0 %v629
  %2080 = vmatpush1.bf16.msra.mxu0 %v628
  %2081 = vmatprep.subr.bf16.mxu0 %v637
  %2082 = vmatpush1.bf16.msra.mxu0 %v636
  %2083 = vmatprep.subr.bf16.mxu0 %v645
  %2084 = vmatpush1.bf16.msra.mxu0 %v644
  %2085 = vmatprep.subr.bf16.mxu0 %v653
  %2086 = vmatpush1.bf16.msra.mxu0 %v652
  %2087 = vmatprep.subr.bf16.mxu0 %v661
  %2088 = vmatpush1.bf16.msra.mxu0 %v660
  %2089 = vmatprep.subr.bf16.mxu0 %v669
  %2090 = vmatpush1.bf16.msra.mxu0 %v668
  %2091 = vmatprep.subr.bf16.mxu0 %v677
  %2092 = vmatpush1.bf16.msra.mxu0 %v676
  %2093 = vmatprep.subr.bf16.mxu0 %v685
  %2094 = vmatpush1.bf16.msra.mxu0 %v684
  %2095 = vmatprep.mubr.bf16.mxu0 %v1969
  %2096 = vmatmul.mubr.bf16.gmra.mrb[0].mxu0 %v1968
  %v2097 = vpop.f32.mrb[0].mxu0
  %v2098 = vadd.f32 0.0, %v2097
  %v2099 = vpop.f32.mrb[0].mxu0
  %v2100 = vadd.f32 0.0, %v2099
  %v2101 = vpop.f32.mrb[0].mxu0
  %v2102 = vpop.f32.mrb[0].mxu0
  %2103 = vdwg.mxu0
  %2104 = vmatprep.subr.bf16.mxu0 %v567
  %2105 = vmatpush1.bf16.msra.mxu0 %v566
  %2106 = vmatprep.subr.bf16.mxu0 %v575
  %2107 = vmatpush1.bf16.msra.mxu0 %v574
  %2108 = vmatprep.subr.bf16.mxu0 %v583
  %2109 = vmatpush1.bf16.msra.mxu0 %v582
  %2110 = vmatprep.subr.bf16.mxu0 %v591
  %2111 = vmatpush1.bf16.msra.mxu0 %v590
  %2112 = vmatprep.subr.bf16.mxu0 %v599
  %2113 = vmatpush1.bf16.msra.mxu0 %v598
  %2114 = vmatprep.subr.bf16.mxu0 %v607
  %2115 = vmatpush1.bf16.msra.mxu0 %v606
  %2116 = vmatprep.subr.bf16.mxu0 %v615
  %2117 = vmatpush1.bf16.msra.mxu0 %v614
  %2118 = vmatprep.subr.bf16.mxu0 %v623
  %2119 = vmatpush1.bf16.msra.mxu0 %v622
  %2120 = vmatprep.subr.bf16.mxu0 %v631
  %2121 = vmatpush1.bf16.msra.mxu0 %v630
  %2122 = vmatprep.subr.bf16.mxu0 %v639
  %2123 = vmatpush1.bf16.msra.mxu0 %v638
  %2124 = vmatprep.subr.bf16.mxu0 %v647
  %2125 = vmatpush1.bf16.msra.mxu0 %v646
  %2126 = vmatprep.subr.bf16.mxu0 %v655
  %2127 = vmatpush1.bf16.msra.mxu0 %v654
  %2128 = vmatprep.subr.bf16.mxu0 %v663
  %2129 = vmatpush1.bf16.msra.mxu0 %v662
  %2130 = vmatprep.subr.bf16.mxu0 %v671
  %2131 = vmatpush1.bf16.msra.mxu0 %v670
  %2132 = vmatprep.subr.bf16.mxu0 %v679
  %2133 = vmatpush1.bf16.msra.mxu0 %v678
  %2134 = vmatprep.subr.bf16.mxu0 %v687
  %2135 = vmatpush1.bf16.msra.mxu0 %v686
  %2136 = vmatprep.mubr.bf16.mxu0 %v1969
  %2137 = vmatmul.mubr.bf16.gmra.mrb[0].mxu0 %v1968
  %v2138 = vpop.f32.mrb[0].mxu0
  %v2139 = vadd.f32 0.0, %v2138
  %v2140 = vpop.f32.mrb[0].mxu0
  %v2141 = vadd.f32 0.0, %v2140
  %v2142 = vpop.f32.mrb[0].mxu0
  %v2143 = vpop.f32.mrb[0].mxu0
  %2144 = vdwg.mxu0
  %v2145 = vadd.f32 %v1973, %v2016
  %v2146 = vadd.f32 %v1974, %v2018
  %v2147 = vadd.f32 %v1975, %v2057
  %v2148 = vadd.f32 %v1976, %v2059
  %v2149 = vadd.f32 %v1977, %v2098
  %v2150 = vadd.f32 %v1978, %v2100
  %v2151 = vadd.f32 %v1979, %v2139
  %v2152 = vadd.f32 %v1980, %v2141
  %v2153 = vxor.u32 %v2145, 2147483648
  %v2154 = vxor.u32 %v2146, 2147483648
  %v2155 = vxor.u32 %v2147, 2147483648
  %v2156 = vxor.u32 %v2148, 2147483648
  %v2157 = vxor.u32 %v2149, 2147483648
  %v2158 = vxor.u32 %v2150, 2147483648
  %v2159 = vmul.f32 %v2153, 1.442695
  %v2160 = vpow.pop %v2159
  %v2161 = vmul.f32 %v2154, 1.442695
  %v2162 = vpow.pop %v2161
  %v2163 = vmul.f32 %v2155, 1.442695
  %v2164 = vpow.pop %v2163
  %v2165 = vmul.f32 %v2156, 1.442695
  %v2166 = vpow.pop %v2165
  %v2167 = vmul.f32 %v2157, 1.442695
  %v2168 = vpow.pop %v2167
  %v2169 = vmul.f32 %v2158, 1.442695
  %v2170 = vpow.pop %v2169
  %v2171 = vadd.f32 %v2160, 1.0
  %v2172 = vadd.f32 %v2162, 1.0
  %v2173 = vadd.f32 %v2164, 1.0
  %v2174 = vadd.f32 %v2166, 1.0
  %v2175 = vadd.f32 %v2168, 1.0
  %v2176 = vadd.f32 %v2170, 1.0
  %v2177 = vrcp.pop %v2171
  %v2178 = vmul.f32 1.0, %v2177
  %v2179 = vrcp.pop %v2172
  %v2180 = vmul.f32 1.0, %v2179
  %v2181 = vrcp.pop %v2173
  %v2182 = vmul.f32 1.0, %v2181
  %v2183 = vrcp.pop %v2174
  %v2184 = vmul.f32 1.0, %v2183
  %v2185 = vrcp.pop %v2175
  %v2186 = vmul.f32 1.0, %v2185
  %v2187 = vrcp.pop %v2176
  %v2188 = vmul.f32 1.0, %v2187
  %v2189 = vtanh.pop %v2151
  %v2190 = vtanh.pop %v2152
  %v2191 = vmul.f32 %v2182, %v1962
  %v2192 = vmul.f32 %v2184, %v1963
  %v2193 = vmul.f32 %v2178, %v2189
  %v2194 = vmul.f32 %v2180, %v2190
  %v2195 = vadd.f32 %v2191, %v2193
  %v2196 = vadd.f32 %v2192, %v2194
  %v2197 = vtanh.pop %v2195
  %v2198 = vtanh.pop %v2196
  %v2199 = vmul.f32 %v2186, %v2197
  %v2200 = vmul.f32 %v2188, %v2198
  %v2201 = vpack.c.bf16 %v2199, %v2199
  %v2202 = vpack.c.bf16 %v2200, %v2200
  %s2203 = smul.u32 6, 8
  %s2204 = smul.addr %s2203, 8
  %s2205 = scalar_lea.vmem %s0, %s2204
  %v2206 = vld [vmem:[%s2205] sm:$0xff]
  %v2207 = vld [vmem:[%s2205 + $0x8] sm:$0xff]
  %v2208 = vld [vmem:[%s2205 + $0x10] sm:$0xff]
  %v2209 = vld [vmem:[%s2205 + $0x18] sm:$0xff]
  %v2210 = vld [vmem:[%s2205 + $0x20] sm:$0xff]
  %v2211 = vld [vmem:[%s2205 + $0x28] sm:$0xff]
  %v2212 = vld [vmem:[%s2205 + $0x30] sm:$0xff]
  %v2213 = vld [vmem:[%s2205 + $0x38] sm:$0xff]
  %2214 = vmatprep.subr.bf16.mxu0 %v561
  %2215 = vmatpush1.bf16.msra.mxu0 %v560
  %2216 = vmatprep.subr.bf16.mxu0 %v569
  %2217 = vmatpush1.bf16.msra.mxu0 %v568
  %2218 = vmatprep.subr.bf16.mxu0 %v577
  %2219 = vmatpush1.bf16.msra.mxu0 %v576
  %2220 = vmatprep.subr.bf16.mxu0 %v585
  %2221 = vmatpush1.bf16.msra.mxu0 %v584
  %2222 = vmatprep.subr.bf16.mxu0 %v593
  %2223 = vmatpush1.bf16.msra.mxu0 %v592
  %2224 = vmatprep.subr.bf16.mxu0 %v601
  %2225 = vmatpush1.bf16.msra.mxu0 %v600
  %2226 = vmatprep.subr.bf16.mxu0 %v609
  %2227 = vmatpush1.bf16.msra.mxu0 %v608
  %2228 = vmatprep.subr.bf16.mxu0 %v617
  %2229 = vmatpush1.bf16.msra.mxu0 %v616
  %2230 = vmatprep.subr.bf16.mxu0 %v625
  %2231 = vmatpush1.bf16.msra.mxu0 %v624
  %2232 = vmatprep.subr.bf16.mxu0 %v633
  %2233 = vmatpush1.bf16.msra.mxu0 %v632
  %2234 = vmatprep.subr.bf16.mxu0 %v641
  %2235 = vmatpush1.bf16.msra.mxu0 %v640
  %2236 = vmatprep.subr.bf16.mxu0 %v649
  %2237 = vmatpush1.bf16.msra.mxu0 %v648
  %2238 = vmatprep.subr.bf16.mxu0 %v657
  %2239 = vmatpush1.bf16.msra.mxu0 %v656
  %2240 = vmatprep.subr.bf16.mxu0 %v665
  %2241 = vmatpush1.bf16.msra.mxu0 %v664
  %2242 = vmatprep.subr.bf16.mxu0 %v673
  %2243 = vmatpush1.bf16.msra.mxu0 %v672
  %2244 = vmatprep.subr.bf16.mxu0 %v681
  %2245 = vmatpush1.bf16.msra.mxu0 %v680
  %2246 = vmatprep.mubr.bf16.mxu0 %v2202
  %2247 = vmatmul.mubr.bf16.gmra.mrb[0].mxu0 %v2201
  %v2248 = vpop.f32.mrb[0].mxu0
  %v2249 = vadd.f32 0.0, %v2248
  %v2250 = vpop.f32.mrb[0].mxu0
  %v2251 = vadd.f32 0.0, %v2250
  %v2252 = vpop.f32.mrb[0].mxu0
  %v2253 = vpop.f32.mrb[0].mxu0
  %2254 = vdwg.mxu0
  %2255 = vmatprep.subr.bf16.mxu0 %v563
  %2256 = vmatpush1.bf16.msra.mxu0 %v562
  %2257 = vmatprep.subr.bf16.mxu0 %v571
  %2258 = vmatpush1.bf16.msra.mxu0 %v570
  %2259 = vmatprep.subr.bf16.mxu0 %v579
  %2260 = vmatpush1.bf16.msra.mxu0 %v578
  %2261 = vmatprep.subr.bf16.mxu0 %v587
  %2262 = vmatpush1.bf16.msra.mxu0 %v586
  %2263 = vmatprep.subr.bf16.mxu0 %v595
  %2264 = vmatpush1.bf16.msra.mxu0 %v594
  %2265 = vmatprep.subr.bf16.mxu0 %v603
  %2266 = vmatpush1.bf16.msra.mxu0 %v602
  %2267 = vmatprep.subr.bf16.mxu0 %v611
  %2268 = vmatpush1.bf16.msra.mxu0 %v610
  %2269 = vmatprep.subr.bf16.mxu0 %v619
  %2270 = vmatpush1.bf16.msra.mxu0 %v618
  %2271 = vmatprep.subr.bf16.mxu0 %v627
  %2272 = vmatpush1.bf16.msra.mxu0 %v626
  %2273 = vmatprep.subr.bf16.mxu0 %v635
  %2274 = vmatpush1.bf16.msra.mxu0 %v634
  %2275 = vmatprep.subr.bf16.mxu0 %v643
  %2276 = vmatpush1.bf16.msra.mxu0 %v642
  %2277 = vmatprep.subr.bf16.mxu0 %v651
  %2278 = vmatpush1.bf16.msra.mxu0 %v650
  %2279 = vmatprep.subr.bf16.mxu0 %v659
  %2280 = vmatpush1.bf16.msra.mxu0 %v658
  %2281 = vmatprep.subr.bf16.mxu0 %v667
  %2282 = vmatpush1.bf16.msra.mxu0 %v666
  %2283 = vmatprep.subr.bf16.mxu0 %v675
  %2284 = vmatpush1.bf16.msra.mxu0 %v674
  %2285 = vmatprep.subr.bf16.mxu0 %v683
  %2286 = vmatpush1.bf16.msra.mxu0 %v682
  %2287 = vmatprep.mubr.bf16.mxu0 %v2202
  %2288 = vmatmul.mubr.bf16.gmra.mrb[0].mxu0 %v2201
  %v2289 = vpop.f32.mrb[0].mxu0
  %v2290 = vadd.f32 0.0, %v2289
  %v2291 = vpop.f32.mrb[0].mxu0
  %v2292 = vadd.f32 0.0, %v2291
  %v2293 = vpop.f32.mrb[0].mxu0
  %v2294 = vpop.f32.mrb[0].mxu0
  %2295 = vdwg.mxu0
  %2296 = vmatprep.subr.bf16.mxu0 %v565
  %2297 = vmatpush1.bf16.msra.mxu0 %v564
  %2298 = vmatprep.subr.bf16.mxu0 %v573
  %2299 = vmatpush1.bf16.msra.mxu0 %v572
  %2300 = vmatprep.subr.bf16.mxu0 %v581
  %2301 = vmatpush1.bf16.msra.mxu0 %v580
  %2302 = vmatprep.subr.bf16.mxu0 %v589
  %2303 = vmatpush1.bf16.msra.mxu0 %v588
  %2304 = vmatprep.subr.bf16.mxu0 %v597
  %2305 = vmatpush1.bf16.msra.mxu0 %v596
  %2306 = vmatprep.subr.bf16.mxu0 %v605
  %2307 = vmatpush1.bf16.msra.mxu0 %v604
  %2308 = vmatprep.subr.bf16.mxu0 %v613
  %2309 = vmatpush1.bf16.msra.mxu0 %v612
  %2310 = vmatprep.subr.bf16.mxu0 %v621
  %2311 = vmatpush1.bf16.msra.mxu0 %v620
  %2312 = vmatprep.subr.bf16.mxu0 %v629
  %2313 = vmatpush1.bf16.msra.mxu0 %v628
  %2314 = vmatprep.subr.bf16.mxu0 %v637
  %2315 = vmatpush1.bf16.msra.mxu0 %v636
  %2316 = vmatprep.subr.bf16.mxu0 %v645
  %2317 = vmatpush1.bf16.msra.mxu0 %v644
  %2318 = vmatprep.subr.bf16.mxu0 %v653
  %2319 = vmatpush1.bf16.msra.mxu0 %v652
  %2320 = vmatprep.subr.bf16.mxu0 %v661
  %2321 = vmatpush1.bf16.msra.mxu0 %v660
  %2322 = vmatprep.subr.bf16.mxu0 %v669
  %2323 = vmatpush1.bf16.msra.mxu0 %v668
  %2324 = vmatprep.subr.bf16.mxu0 %v677
  %2325 = vmatpush1.bf16.msra.mxu0 %v676
  %2326 = vmatprep.subr.bf16.mxu0 %v685
  %2327 = vmatpush1.bf16.msra.mxu0 %v684
  %2328 = vmatprep.mubr.bf16.mxu0 %v2202
  %2329 = vmatmul.mubr.bf16.gmra.mrb[0].mxu0 %v2201
  %v2330 = vpop.f32.mrb[0].mxu0
  %v2331 = vadd.f32 0.0, %v2330
  %v2332 = vpop.f32.mrb[0].mxu0
  %v2333 = vadd.f32 0.0, %v2332
  %v2334 = vpop.f32.mrb[0].mxu0
  %v2335 = vpop.f32.mrb[0].mxu0
  %2336 = vdwg.mxu0
  %2337 = vmatprep.subr.bf16.mxu0 %v567
  %2338 = vmatpush1.bf16.msra.mxu0 %v566
  %2339 = vmatprep.subr.bf16.mxu0 %v575
  %2340 = vmatpush1.bf16.msra.mxu0 %v574
  %2341 = vmatprep.subr.bf16.mxu0 %v583
  %2342 = vmatpush1.bf16.msra.mxu0 %v582
  %2343 = vmatprep.subr.bf16.mxu0 %v591
  %2344 = vmatpush1.bf16.msra.mxu0 %v590
  %2345 = vmatprep.subr.bf16.mxu0 %v599
  %2346 = vmatpush1.bf16.msra.mxu0 %v598
  %2347 = vmatprep.subr.bf16.mxu0 %v607
  %2348 = vmatpush1.bf16.msra.mxu0 %v606
  %2349 = vmatprep.subr.bf16.mxu0 %v615
  %2350 = vmatpush1.bf16.msra.mxu0 %v614
  %2351 = vmatprep.subr.bf16.mxu0 %v623
  %2352 = vmatpush1.bf16.msra.mxu0 %v622
  %2353 = vmatprep.subr.bf16.mxu0 %v631
  %2354 = vmatpush1.bf16.msra.mxu0 %v630
  %2355 = vmatprep.subr.bf16.mxu0 %v639
  %2356 = vmatpush1.bf16.msra.mxu0 %v638
  %2357 = vmatprep.subr.bf16.mxu0 %v647
  %2358 = vmatpush1.bf16.msra.mxu0 %v646
  %2359 = vmatprep.subr.bf16.mxu0 %v655
  %2360 = vmatpush1.bf16.msra.mxu0 %v654
  %2361 = vmatprep.subr.bf16.mxu0 %v663
  %2362 = vmatpush1.bf16.msra.mxu0 %v662
  %2363 = vmatprep.subr.bf16.mxu0 %v671
  %2364 = vmatpush1.bf16.msra.mxu0 %v670
  %2365 = vmatprep.subr.bf16.mxu0 %v679
  %2366 = vmatpush1.bf16.msra.mxu0 %v678
  %2367 = vmatprep.subr.bf16.mxu0 %v687
  %2368 = vmatpush1.bf16.msra.mxu0 %v686
  %2369 = vmatprep.mubr.bf16.mxu0 %v2202
  %2370 = vmatmul.mubr.bf16.gmra.mrb[0].mxu0 %v2201
  %v2371 = vpop.f32.mrb[0].mxu0
  %v2372 = vadd.f32 0.0, %v2371
  %v2373 = vpop.f32.mrb[0].mxu0
  %v2374 = vadd.f32 0.0, %v2373
  %v2375 = vpop.f32.mrb[0].mxu0
  %v2376 = vpop.f32.mrb[0].mxu0
  %2377 = vdwg.mxu0
  %v2378 = vadd.f32 %v2206, %v2249
  %v2379 = vadd.f32 %v2207, %v2251
  %v2380 = vadd.f32 %v2208, %v2290
  %v2381 = vadd.f32 %v2209, %v2292
  %v2382 = vadd.f32 %v2210, %v2331
  %v2383 = vadd.f32 %v2211, %v2333
  %v2384 = vadd.f32 %v2212, %v2372
  %v2385 = vadd.f32 %v2213, %v2374
  %v2386 = vxor.u32 %v2378, 2147483648
  %v2387 = vxor.u32 %v2379, 2147483648
  %v2388 = vxor.u32 %v2380, 2147483648
  %v2389 = vxor.u32 %v2381, 2147483648
  %v2390 = vxor.u32 %v2382, 2147483648
  %v2391 = vxor.u32 %v2383, 2147483648
  %v2392 = vmul.f32 %v2386, 1.442695
  %v2393 = vpow.pop %v2392
  %v2394 = vmul.f32 %v2387, 1.442695
  %v2395 = vpow.pop %v2394
  %v2396 = vmul.f32 %v2388, 1.442695
  %v2397 = vpow.pop %v2396
  %v2398 = vmul.f32 %v2389, 1.442695
  %v2399 = vpow.pop %v2398
  %v2400 = vmul.f32 %v2390, 1.442695
  %v2401 = vpow.pop %v2400
  %v2402 = vmul.f32 %v2391, 1.442695
  %v2403 = vpow.pop %v2402
  %v2404 = vadd.f32 %v2393, 1.0
  %v2405 = vadd.f32 %v2395, 1.0
  %v2406 = vadd.f32 %v2397, 1.0
  %v2407 = vadd.f32 %v2399, 1.0
  %v2408 = vadd.f32 %v2401, 1.0
  %v2409 = vadd.f32 %v2403, 1.0
  %v2410 = vrcp.pop %v2404
  %v2411 = vmul.f32 1.0, %v2410
  %v2412 = vrcp.pop %v2405
  %v2413 = vmul.f32 1.0, %v2412
  %v2414 = vrcp.pop %v2406
  %v2415 = vmul.f32 1.0, %v2414
  %v2416 = vrcp.pop %v2407
  %v2417 = vmul.f32 1.0, %v2416
  %v2418 = vrcp.pop %v2408
  %v2419 = vmul.f32 1.0, %v2418
  %v2420 = vrcp.pop %v2409
  %v2421 = vmul.f32 1.0, %v2420
  %v2422 = vtanh.pop %v2384
  %v2423 = vtanh.pop %v2385
  %v2424 = vmul.f32 %v2415, %v2195
  %v2425 = vmul.f32 %v2417, %v2196
  %v2426 = vmul.f32 %v2411, %v2422
  %v2427 = vmul.f32 %v2413, %v2423
  %v2428 = vadd.f32 %v2424, %v2426
  %v2429 = vadd.f32 %v2425, %v2427
  %v2430 = vtanh.pop %v2428
  %v2431 = vtanh.pop %v2429
  %v2432 = vmul.f32 %v2419, %v2430
  %v2433 = vmul.f32 %v2421, %v2431
  %v2434 = vpack.c.bf16 %v2432, %v2432
  %v2435 = vpack.c.bf16 %v2433, %v2433
  %s2436 = smul.u32 7, 8
  %s2437 = smul.addr %s2436, 8
  %s2438 = scalar_lea.vmem %s0, %s2437
  %v2439 = vld [vmem:[%s2438] sm:$0xff]
  %v2440 = vld [vmem:[%s2438 + $0x8] sm:$0xff]
  %v2441 = vld [vmem:[%s2438 + $0x10] sm:$0xff]
  %v2442 = vld [vmem:[%s2438 + $0x18] sm:$0xff]
  %v2443 = vld [vmem:[%s2438 + $0x20] sm:$0xff]
  %v2444 = vld [vmem:[%s2438 + $0x28] sm:$0xff]
  %v2445 = vld [vmem:[%s2438 + $0x30] sm:$0xff]
  %v2446 = vld [vmem:[%s2438 + $0x38] sm:$0xff]
  %2447 = vmatprep.subr.bf16.mxu0 %v561
  %2448 = vmatpush1.bf16.msra.mxu0 %v560
  %2449 = vmatprep.subr.bf16.mxu0 %v569
  %2450 = vmatpush1.bf16.msra.mxu0 %v568
  %2451 = vmatprep.subr.bf16.mxu0 %v577
  %2452 = vmatpush1.bf16.msra.mxu0 %v576
  %2453 = vmatprep.subr.bf16.mxu0 %v585
  %2454 = vmatpush1.bf16.msra.mxu0 %v584
  %2455 = vmatprep.subr.bf16.mxu0 %v593
  %2456 = vmatpush1.bf16.msra.mxu0 %v592
  %2457 = vmatprep.subr.bf16.mxu0 %v601
  %2458 = vmatpush1.bf16.msra.mxu0 %v600
  %2459 = vmatprep.subr.bf16.mxu0 %v609
  %2460 = vmatpush1.bf16.msra.mxu0 %v608
  %2461 = vmatprep.subr.bf16.mxu0 %v617
  %2462 = vmatpush1.bf16.msra.mxu0 %v616
  %2463 = vmatprep.subr.bf16.mxu0 %v625
  %2464 = vmatpush1.bf16.msra.mxu0 %v624
  %2465 = vmatprep.subr.bf16.mxu0 %v633
  %2466 = vmatpush1.bf16.msra.mxu0 %v632
  %2467 = vmatprep.subr.bf16.mxu0 %v641
  %2468 = vmatpush1.bf16.msra.mxu0 %v640
  %2469 = vmatprep.subr.bf16.mxu0 %v649
  %2470 = vmatpush1.bf16.msra.mxu0 %v648
  %2471 = vmatprep.subr.bf16.mxu0 %v657
  %2472 = vmatpush1.bf16.msra.mxu0 %v656
  %2473 = vmatprep.subr.bf16.mxu0 %v665
  %2474 = vmatpush1.bf16.msra.mxu0 %v664
  %2475 = vmatprep.subr.bf16.mxu0 %v673
  %2476 = vmatpush1.bf16.msra.mxu0 %v672
  %2477 = vmatprep.subr.bf16.mxu0 %v681
  %2478 = vmatpush1.bf16.msra.mxu0 %v680
  %2479 = vmatprep.mubr.bf16.mxu0 %v2435
  %2480 = vmatmul.mubr.bf16.gmra.mrb[0].mxu0 %v2434
  %v2481 = vpop.f32.mrb[0].mxu0
  %v2482 = vadd.f32 0.0, %v2481
  %v2483 = vpop.f32.mrb[0].mxu0
  %v2484 = vadd.f32 0.0, %v2483
  %v2485 = vpop.f32.mrb[0].mxu0
  %v2486 = vpop.f32.mrb[0].mxu0
  %2487 = vdwg.mxu0
  %2488 = vmatprep.subr.bf16.mxu0 %v563
  %2489 = vmatpush1.bf16.msra.mxu0 %v562
  %2490 = vmatprep.subr.bf16.mxu0 %v571
  %2491 = vmatpush1.bf16.msra.mxu0 %v570
  %2492 = vmatprep.subr.bf16.mxu0 %v579
  %2493 = vmatpush1.bf16.msra.mxu0 %v578
  %2494 = vmatprep.subr.bf16.mxu0 %v587
  %2495 = vmatpush1.bf16.msra.mxu0 %v586
  %2496 = vmatprep.subr.bf16.mxu0 %v595
  %2497 = vmatpush1.bf16.msra.mxu0 %v594
  %2498 = vmatprep.subr.bf16.mxu0 %v603
  %2499 = vmatpush1.bf16.msra.mxu0 %v602
  %2500 = vmatprep.subr.bf16.mxu0 %v611
  %2501 = vmatpush1.bf16.msra.mxu0 %v610
  %2502 = vmatprep.subr.bf16.mxu0 %v619
  %2503 = vmatpush1.bf16.msra.mxu0 %v618
  %2504 = vmatprep.subr.bf16.mxu0 %v627
  %2505 = vmatpush1.bf16.msra.mxu0 %v626
  %2506 = vmatprep.subr.bf16.mxu0 %v635
  %2507 = vmatpush1.bf16.msra.mxu0 %v634
  %2508 = vmatprep.subr.bf16.mxu0 %v643
  %2509 = vmatpush1.bf16.msra.mxu0 %v642
  %2510 = vmatprep.subr.bf16.mxu0 %v651
  %2511 = vmatpush1.bf16.msra.mxu0 %v650
  %2512 = vmatprep.subr.bf16.mxu0 %v659
  %2513 = vmatpush1.bf16.msra.mxu0 %v658
  %2514 = vmatprep.subr.bf16.mxu0 %v667
  %2515 = vmatpush1.bf16.msra.mxu0 %v666
  %2516 = vmatprep.subr.bf16.mxu0 %v675
  %2517 = vmatpush1.bf16.msra.mxu0 %v674
  %2518 = vmatprep.subr.bf16.mxu0 %v683
  %2519 = vmatpush1.bf16.msra.mxu0 %v682
  %2520 = vmatprep.mubr.bf16.mxu0 %v2435
  %2521 = vmatmul.mubr.bf16.gmra.mrb[0].mxu0 %v2434
  %v2522 = vpop.f32.mrb[0].mxu0
  %v2523 = vadd.f32 0.0, %v2522
  %v2524 = vpop.f32.mrb[0].mxu0
  %v2525 = vadd.f32 0.0, %v2524
  %v2526 = vpop.f32.mrb[0].mxu0
  %v2527 = vpop.f32.mrb[0].mxu0
  %2528 = vdwg.mxu0
  %2529 = vmatprep.subr.bf16.mxu0 %v565
  %2530 = vmatpush1.bf16.msra.mxu0 %v564
  %2531 = vmatprep.subr.bf16.mxu0 %v573
  %2532 = vmatpush1.bf16.msra.mxu0 %v572
  %2533 = vmatprep.subr.bf16.mxu0 %v581
  %2534 = vmatpush1.bf16.msra.mxu0 %v580
  %2535 = vmatprep.subr.bf16.mxu0 %v589
  %2536 = vmatpush1.bf16.msra.mxu0 %v588
  %2537 = vmatprep.subr.bf16.mxu0 %v597
  %2538 = vmatpush1.bf16.msra.mxu0 %v596
  %2539 = vmatprep.subr.bf16.mxu0 %v605
  %2540 = vmatpush1.bf16.msra.mxu0 %v604
  %2541 = vmatprep.subr.bf16.mxu0 %v613
  %2542 = vmatpush1.bf16.msra.mxu0 %v612
  %2543 = vmatprep.subr.bf16.mxu0 %v621
  %2544 = vmatpush1.bf16.msra.mxu0 %v620
  %2545 = vmatprep.subr.bf16.mxu0 %v629
  %2546 = vmatpush1.bf16.msra.mxu0 %v628
  %2547 = vmatprep.subr.bf16.mxu0 %v637
  %2548 = vmatpush1.bf16.msra.mxu0 %v636
  %2549 = vmatprep.subr.bf16.mxu0 %v645
  %2550 = vmatpush1.bf16.msra.mxu0 %v644
  %2551 = vmatprep.subr.bf16.mxu0 %v653
  %2552 = vmatpush1.bf16.msra.mxu0 %v652
  %2553 = vmatprep.subr.bf16.mxu0 %v661
  %2554 = vmatpush1.bf16.msra.mxu0 %v660
  %2555 = vmatprep.subr.bf16.mxu0 %v669
  %2556 = vmatpush1.bf16.msra.mxu0 %v668
  %2557 = vmatprep.subr.bf16.mxu0 %v677
  %2558 = vmatpush1.bf16.msra.mxu0 %v676
  %2559 = vmatprep.subr.bf16.mxu0 %v685
  %2560 = vmatpush1.bf16.msra.mxu0 %v684
  %2561 = vmatprep.mubr.bf16.mxu0 %v2435
  %2562 = vmatmul.mubr.bf16.gmra.mrb[0].mxu0 %v2434
  %v2563 = vpop.f32.mrb[0].mxu0
  %v2564 = vadd.f32 0.0, %v2563
  %v2565 = vpop.f32.mrb[0].mxu0
  %v2566 = vadd.f32 0.0, %v2565
  %v2567 = vpop.f32.mrb[0].mxu0
  %v2568 = vpop.f32.mrb[0].mxu0
  %2569 = vdwg.mxu0
  %2570 = vmatprep.subr.bf16.mxu0 %v567
  %2571 = vmatpush1.bf16.msra.mxu0 %v566
  %2572 = vmatprep.subr.bf16.mxu0 %v575
  %2573 = vmatpush1.bf16.msra.mxu0 %v574
  %2574 = vmatprep.subr.bf16.mxu0 %v583
  %2575 = vmatpush1.bf16.msra.mxu0 %v582
  %2576 = vmatprep.subr.bf16.mxu0 %v591
  %2577 = vmatpush1.bf16.msra.mxu0 %v590
  %2578 = vmatprep.subr.bf16.mxu0 %v599
  %2579 = vmatpush1.bf16.msra.mxu0 %v598
  %2580 = vmatprep.subr.bf16.mxu0 %v607
  %2581 = vmatpush1.bf16.msra.mxu0 %v606
  %2582 = vmatprep.subr.bf16.mxu0 %v615
  %2583 = vmatpush1.bf16.msra.mxu0 %v614
  %2584 = vmatprep.subr.bf16.mxu0 %v623
  %2585 = vmatpush1.bf16.msra.mxu0 %v622
  %2586 = vmatprep.subr.bf16.mxu0 %v631
  %2587 = vmatpush1.bf16.msra.mxu0 %v630
  %2588 = vmatprep.subr.bf16.mxu0 %v639
  %2589 = vmatpush1.bf16.msra.mxu0 %v638
  %2590 = vmatprep.subr.bf16.mxu0 %v647
  %2591 = vmatpush1.bf16.msra.mxu0 %v646
  %2592 = vmatprep.subr.bf16.mxu0 %v655
  %2593 = vmatpush1.bf16.msra.mxu0 %v654
  %2594 = vmatprep.subr.bf16.mxu0 %v663
  %2595 = vmatpush1.bf16.msra.mxu0 %v662
  %2596 = vmatprep.subr.bf16.mxu0 %v671
  %2597 = vmatpush1.bf16.msra.mxu0 %v670
  %2598 = vmatprep.subr.bf16.mxu0 %v679
  %2599 = vmatpush1.bf16.msra.mxu0 %v678
  %2600 = vmatprep.subr.bf16.mxu0 %v687
  %2601 = vmatpush1.bf16.msra.mxu0 %v686
  %2602 = vmatprep.mubr.bf16.mxu0 %v2435
  %2603 = vmatmul.mubr.bf16.gmra.mrb[0].mxu0 %v2434
  %v2604 = vpop.f32.mrb[0].mxu0
  %v2605 = vadd.f32 0.0, %v2604
  %v2606 = vpop.f32.mrb[0].mxu0
  %v2607 = vadd.f32 0.0, %v2606
  %v2608 = vpop.f32.mrb[0].mxu0
  %v2609 = vpop.f32.mrb[0].mxu0
  %2610 = vdwg.mxu0
  %v2611 = vadd.f32 %v2439, %v2482
  %v2612 = vadd.f32 %v2440, %v2484
  %v2613 = vadd.f32 %v2441, %v2523
  %v2614 = vadd.f32 %v2442, %v2525
  %v2615 = vadd.f32 %v2443, %v2564
  %v2616 = vadd.f32 %v2444, %v2566
  %v2617 = vadd.f32 %v2445, %v2605
  %v2618 = vadd.f32 %v2446, %v2607
  %v2619 = vxor.u32 %v2611, 2147483648
  %v2620 = vxor.u32 %v2612, 2147483648
  %v2621 = vxor.u32 %v2613, 2147483648
  %v2622 = vxor.u32 %v2614, 2147483648
  %v2623 = vxor.u32 %v2615, 2147483648
  %v2624 = vxor.u32 %v2616, 2147483648
  %v2625 = vmul.f32 %v2619, 1.442695
  %v2626 = vpow.pop %v2625
  %v2627 = vmul.f32 %v2620, 1.442695
  %v2628 = vpow.pop %v2627
  %v2629 = vmul.f32 %v2621, 1.442695
  %v2630 = vpow.pop %v2629
  %v2631 = vmul.f32 %v2622, 1.442695
  %v2632 = vpow.pop %v2631
  %v2633 = vmul.f32 %v2623, 1.442695
  %v2634 = vpow.pop %v2633
  %v2635 = vmul.f32 %v2624, 1.442695
  %v2636 = vpow.pop %v2635
  %v2637 = vadd.f32 %v2626, 1.0
  %v2638 = vadd.f32 %v2628, 1.0
  %v2639 = vadd.f32 %v2630, 1.0
  %v2640 = vadd.f32 %v2632, 1.0
  %v2641 = vadd.f32 %v2634, 1.0
  %v2642 = vadd.f32 %v2636, 1.0
  %v2643 = vrcp.pop %v2637
  %v2644 = vmul.f32 1.0, %v2643
  %v2645 = vrcp.pop %v2638
  %v2646 = vmul.f32 1.0, %v2645
  %v2647 = vrcp.pop %v2639
  %v2648 = vmul.f32 1.0, %v2647
  %v2649 = vrcp.pop %v2640
  %v2650 = vmul.f32 1.0, %v2649
  %v2651 = vrcp.pop %v2641
  %v2652 = vmul.f32 1.0, %v2651
  %v2653 = vrcp.pop %v2642
  %v2654 = vmul.f32 1.0, %v2653
  %v2655 = vtanh.pop %v2617
  %v2656 = vtanh.pop %v2618
  %v2657 = vmul.f32 %v2648, %v2428
  %v2658 = vmul.f32 %v2650, %v2429
  %v2659 = vmul.f32 %v2644, %v2655
  %v2660 = vmul.f32 %v2646, %v2656
  %v2661 = vadd.f32 %v2657, %v2659
  %v2662 = vadd.f32 %v2658, %v2660
  %v2663 = vtanh.pop %v2661
  %v2664 = vtanh.pop %v2662
  %v2665 = vmul.f32 %v2652, %v2663
  %v2666 = vmul.f32 %v2654, %v2664
  %v2667 = vpack.c.bf16 %v2665, %v2665
  %v2668 = vpack.c.bf16 %v2666, %v2666
  %v2671 = vunpack.c.l.b16 %v2667
  %v2672 = vunpack.c.l.b16 %v2668
  %v2673 = vpack.c.b16 %v2672, %v2671
  %2675 = vst [vmem:[#allocation2] sm:$0xff] %v2673
  %2676 = vst [vmem:[#allocation3] sm:$0xff] %v2661
  %2677 = vst [vmem:[#allocation3 + $0x8] sm:$0xff] %v2662
  // Predicated region
  $region22: #{model_forward.1} parent=0 // pred_check
    %p2678 = pneg %p20
  $region23: #{model_forward.1} parent=0 // pred_check_branch
    %2680 = sbr.rel (%p2678) target = $region25
  $region24: #{model_forward.1} parent=0 // pred_region
    %v2681 = vunpack.c.l.bf16 %v2667
    %v2682 = vunpack.c.l.bf16 %v2668
    %v2683 = vld [vmem:[%s2] sm:$0x3]
    %v2685 = vlaneseq
    %v2686 = vshrl.u32 %v2685, 7
    %v2687 = vsub.s32 0, %v2686
    %v2688 = vrot.slane %v2683, %v2687
    %v2689 = vlaneseq
    %v2690 = vshrl.u32 %v2689, 7
    %v2691 = vsub.s32 1, %v2690
    %v2692 = vrot.slane %v2683, %v2691
    %v2695 = vmul.f32 %v2681, %v2688
    %v2696 = vmul.f32 %v2682, %v2692
    %v2697 = vadd.f32 %v2695, %v2696
    %2698 = vadd.xlane.f32.xlu0 %v2697
    %v2699 = vpop.xlane.xlu0 %2698
    %v2700 = vld [vmem:[#allocation4] sm:$0x1]
    %v2702 = vlaneseq
    %v2703 = vshrl.u32 %v2702, 7
    %v2704 = vsub.s32 0, %v2703
    %v2705 = vrot.slane %v2700, %v2704
    %v2707 = vadd.f32 %v2699, %v2705
    %2709 = vset.pattern.permute.xlu0 0
    %2710 = vperm.xlu0 %2709, %v2707
    %v2711 = vpop.permute.xlu0 %2710
    %v2713 = vmax.f32 %v2711, 0.0
    %2714 = vst [vmem:[%s4] sm:$0xff] %v2713
  $region25: #{model_forward.1} parent=0 // pred_fallthru
    _
  // Predicated region
  $region26: #{model_forward.1} parent=0 // pred_check
    _
  $region27: #{model_forward.1} parent=0 // pred_check_branch
    %2716 = sbr.rel (0) target = $region29
  $region28: #{model_forward.1} parent=0 // pred_region
    _
  $region29: #{model_forward.1} parent=0 // pred_fallthru
    _
  // Predicated region
  $region30: #{model_forward.1} parent=0 // pred_check
    _
  $region31: #{model_forward.1} parent=0 // pred_check_branch
    %2718 = sbr.rel (0) target = $region33
  $region32: #{model_forward.1} parent=0 // pred_region
    _
  $region33: #{model_forward.1} parent=0 // pred_fallthru
    _

</llo_original>
